<compile_context>
chip_gen: v7x
topology: tpu7x:2x2x1
jax: 0.10.0
libtpu: 0.0.40
codegen_flags: <defaults>
</compile_context>

<pallas_src>
import jax
import jax.numpy as jnp
from jax import lax
from jax.experimental import pallas as pl
from jax.experimental.pallas import tpu as pltpu

# ----- model hyper-parameters (MusicRNNParams defaults) -----
VOCAB_DIM = 23
EMBEDDING_DIM = 32
HIDDEN_DIM = 256
NUM_LAYERS = 1          # single layer; SelectItem(1)[-1] == final hidden state of that layer
CHORD_DIM = 205
CHORD_DIM_PAD = 256     # pad output features to a lane-friendly multiple of 128


def _rnn_kernel(tok_ref,    # SMEM (T, Bp) int32 tokens (time-major, batch padded)
                proj_ref,   # VMEM (V, 1, H) f32 : emb @ W_ih^T + b_ih + b_hh
                whh_ref,    # VMEM (H, H)   bf16 : W_hh^T
                wout_ref,   # VMEM (H, Cpad) bf16 : W_out^T (zero padded past CHORD_DIM)
                bout_ref,   # VMEM (1, Cpad) f32  : b_out   (zero padded past CHORD_DIM)
                out_ref,    # VMEM (Bp, Cpad) f32 : logits (padded)
                x_ref):     # VMEM scratch (T*Bp, H) f32 : gathered per-step inputs
    T, Bp = tok_ref.shape
    H = whh_ref.shape[0]

    # ---- in-kernel embedding/projection gather (independent of the h chain) ----
    for t in range(T):
        for b in range(Bp):
            # dynamic leading-axis row load from the VMEM projection table
            x_ref[pl.ds(t * Bp + b, 1), :] = proj_ref[tok_ref[t, b]]

    # ---- recurrence: h carried as a VALUE (register resident, ~2 vregs) ----
    # h0 == 0, so the first step needs no matmul.
    h = jnp.tanh(x_ref[pl.ds(0, Bp), :])
    for t in range(1, T):
        # single bf16 MXU matmul on the serial critical path; add + tanh in f32
        hh = jnp.dot(h.astype(jnp.bfloat16), whh_ref[...],
                     preferred_element_type=jnp.float32)
        h = jnp.tanh(x_ref[pl.ds(t * Bp, Bp), :] + hh)

    # ---- epilogue: final hidden state -> padded logits (lane-dense store) ----
    out_ref[...] = (jnp.dot(h.astype(jnp.bfloat16), wout_ref[...],
                            preferred_element_type=jnp.float32)
                    + bout_ref[...]).astype(out_ref.dtype)


def music_rnn_forward(tokens, params):
    """tokens: int32 (B, T) of vocab ids.  Returns (B, CHORD_DIM) float32 logits."""
    emb, w_ih, w_hh, b_ih, b_hh, w_out, b_out = (
        params["embedding"], params["w_ih"], params["w_hh"],
        params["b_ih"], params["b_hh"], params["w_out"], params["b_out"])

    B, T = tokens.shape
    H = HIDDEN_DIM
    Bp = ((B + 7) // 8) * 8                               # sublane-dense batch

    # ---- param-derived prep (tiny): fold embedding + input proj + both biases ----
    # proj_table[v] = emb[v] @ W_ih^T + b_ih + b_hh     -> (V, 1, H) for leading-axis gather
    proj_table = (emb @ w_ih.T + b_ih + b_hh).reshape(VOCAB_DIM, 1, H).astype(jnp.float32)
    whh_t = w_hh.T.astype(jnp.bfloat16)                   # (H, H) bf16 MXU operand
    wout_t = (jnp.zeros((H, CHORD_DIM_PAD), jnp.float32)
              .at[:, :CHORD_DIM].set(w_out.T)).astype(jnp.bfloat16)
    bout = jnp.zeros((1, CHORD_DIM_PAD), jnp.float32).at[0, :CHORD_DIM].set(b_out)

    # ---- tokens: transpose/pad the tiny int32 matrix (NOT the f32 activations) ----
    tok_tm = jnp.zeros((T, Bp), jnp.int32).at[:, :B].set(tokens.T.astype(jnp.int32))

    smem = pl.BlockSpec(memory_space=pltpu.MemorySpace.SMEM)
    vmem = pl.BlockSpec(memory_space=pltpu.MemorySpace.VMEM)

    flops = 2 * T * Bp * H * H + 2 * Bp * H * CHORD_DIM_PAD
    bytes_accessed = (tok_tm.size * 4 + proj_table.size * 4 + whh_t.size * 2
                      + wout_t.size * 2 + bout.size * 4 + Bp * CHORD_DIM_PAD * 4)

    out_pad = pl.pallas_call(
        _rnn_kernel,
        out_shape=jax.ShapeDtypeStruct((Bp, CHORD_DIM_PAD), jnp.float32),
        in_specs=[smem, vmem, vmem, vmem, vmem],
        out_specs=vmem,
        scratch_shapes=[pltpu.VMEM((T * Bp, H), jnp.float32)],
        cost_estimate=pl.CostEstimate(
            flops=flops,
            transcendentals=T * Bp * H,
            bytes_accessed=bytes_accessed),
        # footprint << 1 MiB -> default scoped VMEM limit is plenty on v5e/v6e/v7x
    )(tok_tm, proj_table, whh_t, wout_t, bout)

    return out_pad[:B, :CHORD_DIM]


def init_params(key):
    """Deterministic synthetic weights matching nn.Embedding / nn.RNN / nn.Linear shapes."""
    k = jax.random.split(key, 7)
    s_rnn = 1.0 / jnp.sqrt(HIDDEN_DIM)
    s_lin = 1.0 / jnp.sqrt(HIDDEN_DIM)
    return {
        "embedding": jax.random.normal(k[0], (VOCAB_DIM, EMBEDDING_DIM), jnp.float32),
        "w_ih": jax.random.uniform(k[1], (HIDDEN_DIM, EMBEDDING_DIM), jnp.float32, -s_rnn, s_rnn),
        "w_hh": jax.random.uniform(k[2], (HIDDEN_DIM, HIDDEN_DIM), jnp.float32, -s_rnn, s_rnn),
        "b_ih": jax.random.uniform(k[3], (HIDDEN_DIM,), jnp.float32, -s_rnn, s_rnn),
        "b_hh": jax.random.uniform(k[4], (HIDDEN_DIM,), jnp.float32, -s_rnn, s_rnn),
        "w_out": jax.random.uniform(k[5], (CHORD_DIM, HIDDEN_DIM), jnp.float32, -s_lin, s_lin),
        "b_out": jax.random.uniform(k[6], (CHORD_DIM,), jnp.float32, -s_lin, s_lin),
    }


def music_rnn_reference(tokens, params):
    """Pure-JAX f32 reference of the PyTorch forward (for correctness check)."""
    x = jnp.take(params["embedding"], tokens, axis=0)     # (B, T, E)
    B = x.shape[0]
    h = jnp.zeros((B, HIDDEN_DIM), jnp.float32)

    def step(h, x_t):
        h = jnp.tanh(x_t @ params["w_ih"].T + params["b_ih"]
                     + h @ params["w_hh"].T + params["b_hh"])
        return h, None

    h_final, _ = lax.scan(step, h, jnp.transpose(x, (1, 0, 2)))
    return h_final @ params["w_out"].T + params["b_out"]


if __name__ == "__main__":
    key = jax.random.PRNGKey(0)
    kp, kx = jax.random.split(key)
    params = init_params(kp)

    B, T = 2, 8
    tokens = jax.random.randint(kx, (B, T), 0, VOCAB_DIM, dtype=jnp.int32)

    out = music_rnn_forward(tokens, params)
    out = jax.block_until_ready(out)
    assert out.shape == (B, CHORD_DIM), out.shape

    ref = music_rnn_reference(tokens, params)
    # tolerance loosened vs. the f32 version because W_hh / W_out / h matmul
    # operands are bf16 (accumulation stays f32)
    err = float(jnp.max(jnp.abs(out - ref)))
    assert jnp.allclose(out, ref, atol=2e-2, rtol=2e-2), err

    print("KERNEL_OK")
</pallas_src>

<mosaic_0001>
module attributes {stable_mosaic.version = 11 : i64} {
  func.func @_rnn_kernel(%arg0: memref<8x8xi32, #tpu.memory_space<smem>>, %arg1: memref<23x1x256xf32, #tpu.memory_space<vmem>>, %arg2: memref<256x256xbf16, #tpu.memory_space<vmem>>, %arg3: memref<256x256xbf16, #tpu.memory_space<vmem>>, %arg4: memref<1x256xf32, #tpu.memory_space<vmem>>, %arg5: memref<8x256xf32, #tpu.memory_space<vmem>>, %arg6: memref<64x256xf32, #tpu.memory_space<vmem>>) attributes {dimension_semantics = [], scalar_prefetch = 0 : i64, scratch_operands = 1 : i64, tpu.core_type = #tpu.core_type<tc>} {
    %c0 = arith.constant 0 : index
    %c0_0 = arith.constant 0 : index
    %0 = memref.load %arg0[%c0, %c0_0] : memref<8x8xi32, #tpu.memory_space<smem>>
    %1 = arith.index_cast %0 : i32 to index
    %c0_1 = arith.constant 0 : index
    %c0_2 = arith.constant 0 : index
    %2 = vector.load %arg1[%1, %c0_1, %c0_2] : memref<23x1x256xf32, #tpu.memory_space<vmem>>, vector<1x1x256xf32>
    %3 = vector.shape_cast %2 : vector<1x1x256xf32> to vector<1x256xf32>
    %c0_3 = arith.constant 0 : index
    %c0_4 = arith.constant 0 : index
    %4 = vector.load %arg6[%c0_3, %c0_4] : memref<64x256xf32, #tpu.memory_space<vmem>>, vector<1x256xf32>
    tpu.vector_store %arg6[%c0_3, %c0_4], %3 {strides = array<i32>} : memref<64x256xf32, #tpu.memory_space<vmem>>, vector<1x256xf32>,
    %c0_5 = arith.constant 0 : index
    %c1 = arith.constant 1 : index
    %5 = memref.load %arg0[%c0_5, %c1] : memref<8x8xi32, #tpu.memory_space<smem>>
    %6 = arith.index_cast %5 : i32 to index
    %c0_6 = arith.constant 0 : index
    %c0_7 = arith.constant 0 : index
    %7 = vector.load %arg1[%6, %c0_6, %c0_7] : memref<23x1x256xf32, #tpu.memory_space<vmem>>, vector<1x1x256xf32>
    %8 = vector.shape_cast %7 : vector<1x1x256xf32> to vector<1x256xf32>
    %c1_8 = arith.constant 1 : index
    %c0_9 = arith.constant 0 : index
    %9 = vector.load %arg6[%c1_8, %c0_9] : memref<64x256xf32, #tpu.memory_space<vmem>>, vector<1x256xf32>
    tpu.vector_store %arg6[%c1_8, %c0_9], %8 {strides = array<i32>} : memref<64x256xf32, #tpu.memory_space<vmem>>, vector<1x256xf32>,
    %c0_10 = arith.constant 0 : index
    %c2 = arith.constant 2 : index
    %10 = memref.load %arg0[%c0_10, %c2] : memref<8x8xi32, #tpu.memory_space<smem>>
    %11 = arith.index_cast %10 : i32 to index
    %c0_11 = arith.constant 0 : index
    %c0_12 = arith.constant 0 : index
    %12 = vector.load %arg1[%11, %c0_11, %c0_12] : memref<23x1x256xf32, #tpu.memory_space<vmem>>, vector<1x1x256xf32>
    %13 = vector.shape_cast %12 : vector<1x1x256xf32> to vector<1x256xf32>
    %c2_13 = arith.constant 2 : index
    %c0_14 = arith.constant 0 : index
    %14 = vector.load %arg6[%c2_13, %c0_14] : memref<64x256xf32, #tpu.memory_space<vmem>>, vector<1x256xf32>
    tpu.vector_store %arg6[%c2_13, %c0_14], %13 {strides = array<i32>} : memref<64x256xf32, #tpu.memory_space<vmem>>, vector<1x256xf32>,
    %c0_15 = arith.constant 0 : index
    %c3 = arith.constant 3 : index
    %15 = memref.load %arg0[%c0_15, %c3] : memref<8x8xi32, #tpu.memory_space<smem>>
    %16 = arith.index_cast %15 : i32 to index
    %c0_16 = arith.constant 0 : index
    %c0_17 = arith.constant 0 : index
    %17 = vector.load %arg1[%16, %c0_16, %c0_17] : memref<23x1x256xf32, #tpu.memory_space<vmem>>, vector<1x1x256xf32>
    %18 = vector.shape_cast %17 : vector<1x1x256xf32> to vector<1x256xf32>
    %c3_18 = arith.constant 3 : index
    %c0_19 = arith.constant 0 : index
    %19 = vector.load %arg6[%c3_18, %c0_19] : memref<64x256xf32, #tpu.memory_space<vmem>>, vector<1x256xf32>
    tpu.vector_store %arg6[%c3_18, %c0_19], %18 {strides = array<i32>} : memref<64x256xf32, #tpu.memory_space<vmem>>, vector<1x256xf32>,
    %c0_20 = arith.constant 0 : index
    %c4 = arith.constant 4 : index
    %20 = memref.load %arg0[%c0_20, %c4] : memref<8x8xi32, #tpu.memory_space<smem>>
    %21 = arith.index_cast %20 : i32 to index
    %c0_21 = arith.constant 0 : index
    %c0_22 = arith.constant 0 : index
    %22 = vector.load %arg1[%21, %c0_21, %c0_22] : memref<23x1x256xf32, #tpu.memory_space<vmem>>, vector<1x1x256xf32>
    %23 = vector.shape_cast %22 : vector<1x1x256xf32> to vector<1x256xf32>
    %c4_23 = arith.constant 4 : index
    %c0_24 = arith.constant 0 : index
    %24 = vector.load %arg6[%c4_23, %c0_24] : memref<64x256xf32, #tpu.memory_space<vmem>>, vector<1x256xf32>
    tpu.vector_store %arg6[%c4_23, %c0_24], %23 {strides = array<i32>} : memref<64x256xf32, #tpu.memory_space<vmem>>, vector<1x256xf32>,
    %c0_25 = arith.constant 0 : index
    %c5 = arith.constant 5 : index
    %25 = memref.load %arg0[%c0_25, %c5] : memref<8x8xi32, #tpu.memory_space<smem>>
    %26 = arith.index_cast %25 : i32 to index
    %c0_26 = arith.constant 0 : index
    %c0_27 = arith.constant 0 : index
    %27 = vector.load %arg1[%26, %c0_26, %c0_27] : memref<23x1x256xf32, #tpu.memory_space<vmem>>, vector<1x1x256xf32>
    %28 = vector.shape_cast %27 : vector<1x1x256xf32> to vector<1x256xf32>
    %c5_28 = arith.constant 5 : index
    %c0_29 = arith.constant 0 : index
    %29 = vector.load %arg6[%c5_28, %c0_29] : memref<64x256xf32, #tpu.memory_space<vmem>>, vector<1x256xf32>
    tpu.vector_store %arg6[%c5_28, %c0_29], %28 {strides = array<i32>} : memref<64x256xf32, #tpu.memory_space<vmem>>, vector<1x256xf32>,
    %c0_30 = arith.constant 0 : index
    %c6 = arith.constant 6 : index
    %30 = memref.load %arg0[%c0_30, %c6] : memref<8x8xi32, #tpu.memory_space<smem>>
    %31 = arith.index_cast %30 : i32 to index
    %c0_31 = arith.constant 0 : index
    %c0_32 = arith.constant 0 : index
    %32 = vector.load %arg1[%31, %c0_31, %c0_32] : memref<23x1x256xf32, #tpu.memory_space<vmem>>, vector<1x1x256xf32>
    %33 = vector.shape_cast %32 : vector<1x1x256xf32> to vector<1x256xf32>
    %c6_33 = arith.constant 6 : index
    %c0_34 = arith.constant 0 : index
    %34 = vector.load %arg6[%c6_33, %c0_34] : memref<64x256xf32, #tpu.memory_space<vmem>>, vector<1x256xf32>
    tpu.vector_store %arg6[%c6_33, %c0_34], %33 {strides = array<i32>} : memref<64x256xf32, #tpu.memory_space<vmem>>, vector<1x256xf32>,
    %c0_35 = arith.constant 0 : index
    %c7 = arith.constant 7 : index
    %35 = memref.load %arg0[%c0_35, %c7] : memref<8x8xi32, #tpu.memory_space<smem>>
    %36 = arith.index_cast %35 : i32 to index
    %c0_36 = arith.constant 0 : index
    %c0_37 = arith.constant 0 : index
    %37 = vector.load %arg1[%36, %c0_36, %c0_37] : memref<23x1x256xf32, #tpu.memory_space<vmem>>, vector<1x1x256xf32>
    %38 = vector.shape_cast %37 : vector<1x1x256xf32> to vector<1x256xf32>
    %c7_38 = arith.constant 7 : index
    %c0_39 = arith.constant 0 : index
    %39 = vector.load %arg6[%c7_38, %c0_39] : memref<64x256xf32, #tpu.memory_space<vmem>>, vector<1x256xf32>
    tpu.vector_store %arg6[%c7_38, %c0_39], %38 {strides = array<i32>} : memref<64x256xf32, #tpu.memory_space<vmem>>, vector<1x256xf32>,
    %c1_40 = arith.constant 1 : index
    %c0_41 = arith.constant 0 : index
    %40 = memref.load %arg0[%c1_40, %c0_41] : memref<8x8xi32, #tpu.memory_space<smem>>
    %41 = arith.index_cast %40 : i32 to index
    %c0_42 = arith.constant 0 : index
    %c0_43 = arith.constant 0 : index
    %42 = vector.load %arg1[%41, %c0_42, %c0_43] : memref<23x1x256xf32, #tpu.memory_space<vmem>>, vector<1x1x256xf32>
    %43 = vector.shape_cast %42 : vector<1x1x256xf32> to vector<1x256xf32>
    %c8 = arith.constant 8 : index
    %c0_44 = arith.constant 0 : index
    %44 = vector.load %arg6[%c8, %c0_44] : memref<64x256xf32, #tpu.memory_space<vmem>>, vector<1x256xf32>
    tpu.vector_store %arg6[%c8, %c0_44], %43 {strides = array<i32>} : memref<64x256xf32, #tpu.memory_space<vmem>>, vector<1x256xf32>,
    %c1_45 = arith.constant 1 : index
    %c1_46 = arith.constant 1 : index
    %45 = memref.load %arg0[%c1_45, %c1_46] : memref<8x8xi32, #tpu.memory_space<smem>>
    %46 = arith.index_cast %45 : i32 to index
    %c0_47 = arith.constant 0 : index
    %c0_48 = arith.constant 0 : index
    %47 = vector.load %arg1[%46, %c0_47, %c0_48] : memref<23x1x256xf32, #tpu.memory_space<vmem>>, vector<1x1x256xf32>
    %48 = vector.shape_cast %47 : vector<1x1x256xf32> to vector<1x256xf32>
    %c9 = arith.constant 9 : index
    %c0_49 = arith.constant 0 : index
    %49 = vector.load %arg6[%c9, %c0_49] : memref<64x256xf32, #tpu.memory_space<vmem>>, vector<1x256xf32>
    tpu.vector_store %arg6[%c9, %c0_49], %48 {strides = array<i32>} : memref<64x256xf32, #tpu.memory_space<vmem>>, vector<1x256xf32>,
    %c1_50 = arith.constant 1 : index
    %c2_51 = arith.constant 2 : index
    %50 = memref.load %arg0[%c1_50, %c2_51] : memref<8x8xi32, #tpu.memory_space<smem>>
    %51 = arith.index_cast %50 : i32 to index
    %c0_52 = arith.constant 0 : index
    %c0_53 = arith.constant 0 : index
    %52 = vector.load %arg1[%51, %c0_52, %c0_53] : memref<23x1x256xf32, #tpu.memory_space<vmem>>, vector<1x1x256xf32>
    %53 = vector.shape_cast %52 : vector<1x1x256xf32> to vector<1x256xf32>
    %c10 = arith.constant 10 : index
    %c0_54 = arith.constant 0 : index
    %54 = vector.load %arg6[%c10, %c0_54] : memref<64x256xf32, #tpu.memory_space<vmem>>, vector<1x256xf32>
    tpu.vector_store %arg6[%c10, %c0_54], %53 {strides = array<i32>} : memref<64x256xf32, #tpu.memory_space<vmem>>, vector<1x256xf32>,
    %c1_55 = arith.constant 1 : index
    %c3_56 = arith.constant 3 : index
    %55 = memref.load %arg0[%c1_55, %c3_56] : memref<8x8xi32, #tpu.memory_space<smem>>
    %56 = arith.index_cast %55 : i32 to index
    %c0_57 = arith.constant 0 : index
    %c0_58 = arith.constant 0 : index
    %57 = vector.load %arg1[%56, %c0_57, %c0_58] : memref<23x1x256xf32, #tpu.memory_space<vmem>>, vector<1x1x256xf32>
    %58 = vector.shape_cast %57 : vector<1x1x256xf32> to vector<1x256xf32>
    %c11 = arith.constant 11 : index
    %c0_59 = arith.constant 0 : index
    %59 = vector.load %arg6[%c11, %c0_59] : memref<64x256xf32, #tpu.memory_space<vmem>>, vector<1x256xf32>
    tpu.vector_store %arg6[%c11, %c0_59], %58 {strides = array<i32>} : memref<64x256xf32, #tpu.memory_space<vmem>>, vector<1x256xf32>,
    %c1_60 = arith.constant 1 : index
    %c4_61 = arith.constant 4 : index
    %60 = memref.load %arg0[%c1_60, %c4_61] : memref<8x8xi32, #tpu.memory_space<smem>>
    %61 = arith.index_cast %60 : i32 to index
    %c0_62 = arith.constant 0 : index
    %c0_63 = arith.constant 0 : index
    %62 = vector.load %arg1[%61, %c0_62, %c0_63] : memref<23x1x256xf32, #tpu.memory_space<vmem>>, vector<1x1x256xf32>
    %63 = vector.shape_cast %62 : vector<1x1x256xf32> to vector<1x256xf32>
    %c12 = arith.constant 12 : index
    %c0_64 = arith.constant 0 : index
    %64 = vector.load %arg6[%c12, %c0_64] : memref<64x256xf32, #tpu.memory_space<vmem>>, vector<1x256xf32>
    tpu.vector_store %arg6[%c12, %c0_64], %63 {strides = array<i32>} : memref<64x256xf32, #tpu.memory_space<vmem>>, vector<1x256xf32>,
    %c1_65 = arith.constant 1 : index
    %c5_66 = arith.constant 5 : index
    %65 = memref.load %arg0[%c1_65, %c5_66] : memref<8x8xi32, #tpu.memory_space<smem>>
    %66 = arith.index_cast %65 : i32 to index
    %c0_67 = arith.constant 0 : index
    %c0_68 = arith.constant 0 : index
    %67 = vector.load %arg1[%66, %c0_67, %c0_68] : memref<23x1x256xf32, #tpu.memory_space<vmem>>, vector<1x1x256xf32>
    %68 = vector.shape_cast %67 : vector<1x1x256xf32> to vector<1x256xf32>
    %c13 = arith.constant 13 : index
    %c0_69 = arith.constant 0 : index
    %69 = vector.load %arg6[%c13, %c0_69] : memref<64x256xf32, #tpu.memory_space<vmem>>, vector<1x256xf32>
    tpu.vector_store %arg6[%c13, %c0_69], %68 {strides = array<i32>} : memref<64x256xf32, #tpu.memory_space<vmem>>, vector<1x256xf32>,
    %c1_70 = arith.constant 1 : index
    %c6_71 = arith.constant 6 : index
    %70 = memref.load %arg0[%c1_70, %c6_71] : memref<8x8xi32, #tpu.memory_space<smem>>
    %71 = arith.index_cast %70 : i32 to index
    %c0_72 = arith.constant 0 : index
    %c0_73 = arith.constant 0 : index
    %72 = vector.load %arg1[%71, %c0_72, %c0_73] : memref<23x1x256xf32, #tpu.memory_space<vmem>>, vector<1x1x256xf32>
    %73 = vector.shape_cast %72 : vector<1x1x256xf32> to vector<1x256xf32>
    %c14 = arith.constant 14 : index
    %c0_74 = arith.constant 0 : index
    %74 = vector.load %arg6[%c14, %c0_74] : memref<64x256xf32, #tpu.memory_space<vmem>>, vector<1x256xf32>
    tpu.vector_store %arg6[%c14, %c0_74], %73 {strides = array<i32>} : memref<64x256xf32, #tpu.memory_space<vmem>>, vector<1x256xf32>,
    %c1_75 = arith.constant 1 : index
    %c7_76 = arith.constant 7 : index
    %75 = memref.load %arg0[%c1_75, %c7_76] : memref<8x8xi32, #tpu.memory_space<smem>>
    %76 = arith.index_cast %75 : i32 to index
    %c0_77 = arith.constant 0 : index
    %c0_78 = arith.constant 0 : index
    %77 = vector.load %arg1[%76, %c0_77, %c0_78] : memref<23x1x256xf32, #tpu.memory_space<vmem>>, vector<1x1x256xf32>
    %78 = vector.shape_cast %77 : vector<1x1x256xf32> to vector<1x256xf32>
    %c15 = arith.constant 15 : index
    %c0_79 = arith.constant 0 : index
    %79 = vector.load %arg6[%c15, %c0_79] : memref<64x256xf32, #tpu.memory_space<vmem>>, vector<1x256xf32>
    tpu.vector_store %arg6[%c15, %c0_79], %78 {strides = array<i32>} : memref<64x256xf32, #tpu.memory_space<vmem>>, vector<1x256xf32>,
    %c2_80 = arith.constant 2 : index
    %c0_81 = arith.constant 0 : index
    %80 = memref.load %arg0[%c2_80, %c0_81] : memref<8x8xi32, #tpu.memory_space<smem>>
    %81 = arith.index_cast %80 : i32 to index
    %c0_82 = arith.constant 0 : index
    %c0_83 = arith.constant 0 : index
    %82 = vector.load %arg1[%81, %c0_82, %c0_83] : memref<23x1x256xf32, #tpu.memory_space<vmem>>, vector<1x1x256xf32>
    %83 = vector.shape_cast %82 : vector<1x1x256xf32> to vector<1x256xf32>
    %c16 = arith.constant 16 : index
    %c0_84 = arith.constant 0 : index
    %84 = vector.load %arg6[%c16, %c0_84] : memref<64x256xf32, #tpu.memory_space<vmem>>, vector<1x256xf32>
    tpu.vector_store %arg6[%c16, %c0_84], %83 {strides = array<i32>} : memref<64x256xf32, #tpu.memory_space<vmem>>, vector<1x256xf32>,
    %c2_85 = arith.constant 2 : index
    %c1_86 = arith.constant 1 : index
    %85 = memref.load %arg0[%c2_85, %c1_86] : memref<8x8xi32, #tpu.memory_space<smem>>
    %86 = arith.index_cast %85 : i32 to index
    %c0_87 = arith.constant 0 : index
    %c0_88 = arith.constant 0 : index
    %87 = vector.load %arg1[%86, %c0_87, %c0_88] : memref<23x1x256xf32, #tpu.memory_space<vmem>>, vector<1x1x256xf32>
    %88 = vector.shape_cast %87 : vector<1x1x256xf32> to vector<1x256xf32>
    %c17 = arith.constant 17 : index
    %c0_89 = arith.constant 0 : index
    %89 = vector.load %arg6[%c17, %c0_89] : memref<64x256xf32, #tpu.memory_space<vmem>>, vector<1x256xf32>
    tpu.vector_store %arg6[%c17, %c0_89], %88 {strides = array<i32>} : memref<64x256xf32, #tpu.memory_space<vmem>>, vector<1x256xf32>,
    %c2_90 = arith.constant 2 : index
    %c2_91 = arith.constant 2 : index
    %90 = memref.load %arg0[%c2_90, %c2_91] : memref<8x8xi32, #tpu.memory_space<smem>>
    %91 = arith.index_cast %90 : i32 to index
    %c0_92 = arith.constant 0 : index
    %c0_93 = arith.constant 0 : index
    %92 = vector.load %arg1[%91, %c0_92, %c0_93] : memref<23x1x256xf32, #tpu.memory_space<vmem>>, vector<1x1x256xf32>
    %93 = vector.shape_cast %92 : vector<1x1x256xf32> to vector<1x256xf32>
    %c18 = arith.constant 18 : index
    %c0_94 = arith.constant 0 : index
    %94 = vector.load %arg6[%c18, %c0_94] : memref<64x256xf32, #tpu.memory_space<vmem>>, vector<1x256xf32>
    tpu.vector_store %arg6[%c18, %c0_94], %93 {strides = array<i32>} : memref<64x256xf32, #tpu.memory_space<vmem>>, vector<1x256xf32>,
    %c2_95 = arith.constant 2 : index
    %c3_96 = arith.constant 3 : index
    %95 = memref.load %arg0[%c2_95, %c3_96] : memref<8x8xi32, #tpu.memory_space<smem>>
    %96 = arith.index_cast %95 : i32 to index
    %c0_97 = arith.constant 0 : index
    %c0_98 = arith.constant 0 : index
    %97 = vector.load %arg1[%96, %c0_97, %c0_98] : memref<23x1x256xf32, #tpu.memory_space<vmem>>, vector<1x1x256xf32>
    %98 = vector.shape_cast %97 : vector<1x1x256xf32> to vector<1x256xf32>
    %c19 = arith.constant 19 : index
    %c0_99 = arith.constant 0 : index
    %99 = vector.load %arg6[%c19, %c0_99] : memref<64x256xf32, #tpu.memory_space<vmem>>, vector<1x256xf32>
    tpu.vector_store %arg6[%c19, %c0_99], %98 {strides = array<i32>} : memref<64x256xf32, #tpu.memory_space<vmem>>, vector<1x256xf32>,
    %c2_100 = arith.constant 2 : index
    %c4_101 = arith.constant 4 : index
    %100 = memref.load %arg0[%c2_100, %c4_101] : memref<8x8xi32, #tpu.memory_space<smem>>
    %101 = arith.index_cast %100 : i32 to index
    %c0_102 = arith.constant 0 : index
    %c0_103 = arith.constant 0 : index
    %102 = vector.load %arg1[%101, %c0_102, %c0_103] : memref<23x1x256xf32, #tpu.memory_space<vmem>>, vector<1x1x256xf32>
    %103 = vector.shape_cast %102 : vector<1x1x256xf32> to vector<1x256xf32>
    %c20 = arith.constant 20 : index
    %c0_104 = arith.constant 0 : index
    %104 = vector.load %arg6[%c20, %c0_104] : memref<64x256xf32, #tpu.memory_space<vmem>>, vector<1x256xf32>
    tpu.vector_store %arg6[%c20, %c0_104], %103 {strides = array<i32>} : memref<64x256xf32, #tpu.memory_space<vmem>>, vector<1x256xf32>,
    %c2_105 = arith.constant 2 : index
    %c5_106 = arith.constant 5 : index
    %105 = memref.load %arg0[%c2_105, %c5_106] : memref<8x8xi32, #tpu.memory_space<smem>>
    %106 = arith.index_cast %105 : i32 to index
    %c0_107 = arith.constant 0 : index
    %c0_108 = arith.constant 0 : index
    %107 = vector.load %arg1[%106, %c0_107, %c0_108] : memref<23x1x256xf32, #tpu.memory_space<vmem>>, vector<1x1x256xf32>
    %108 = vector.shape_cast %107 : vector<1x1x256xf32> to vector<1x256xf32>
    %c21 = arith.constant 21 : index
    %c0_109 = arith.constant 0 : index
    %109 = vector.load %arg6[%c21, %c0_109] : memref<64x256xf32, #tpu.memory_space<vmem>>, vector<1x256xf32>
    tpu.vector_store %arg6[%c21, %c0_109], %108 {strides = array<i32>} : memref<64x256xf32, #tpu.memory_space<vmem>>, vector<1x256xf32>,
    %c2_110 = arith.constant 2 : index
    %c6_111 = arith.constant 6 : index
    %110 = memref.load %arg0[%c2_110, %c6_111] : memref<8x8xi32, #tpu.memory_space<smem>>
    %111 = arith.index_cast %110 : i32 to index
    %c0_112 = arith.constant 0 : index
    %c0_113 = arith.constant 0 : index
    %112 = vector.load %arg1[%111, %c0_112, %c0_113] : memref<23x1x256xf32, #tpu.memory_space<vmem>>, vector<1x1x256xf32>
    %113 = vector.shape_cast %112 : vector<1x1x256xf32> to vector<1x256xf32>
    %c22 = arith.constant 22 : index
    %c0_114 = arith.constant 0 : index
    %114 = vector.load %arg6[%c22, %c0_114] : memref<64x256xf32, #tpu.memory_space<vmem>>, vector<1x256xf32>
    tpu.vector_store %arg6[%c22, %c0_114], %113 {strides = array<i32>} : memref<64x256xf32, #tpu.memory_space<vmem>>, vector<1x256xf32>,
    %c2_115 = arith.constant 2 : index
    %c7_116 = arith.constant 7 : index
    %115 = memref.load %arg0[%c2_115, %c7_116] : memref<8x8xi32, #tpu.memory_space<smem>>
    %116 = arith.index_cast %115 : i32 to index
    %c0_117 = arith.constant 0 : index
    %c0_118 = arith.constant 0 : index
    %117 = vector.load %arg1[%116, %c0_117, %c0_118] : memref<23x1x256xf32, #tpu.memory_space<vmem>>, vector<1x1x256xf32>
    %118 = vector.shape_cast %117 : vector<1x1x256xf32> to vector<1x256xf32>
    %c23 = arith.constant 23 : index
    %c0_119 = arith.constant 0 : index
    %119 = vector.load %arg6[%c23, %c0_119] : memref<64x256xf32, #tpu.memory_space<vmem>>, vector<1x256xf32>
    tpu.vector_store %arg6[%c23, %c0_119], %118 {strides = array<i32>} : memref<64x256xf32, #tpu.memory_space<vmem>>, vector<1x256xf32>,
    %c3_120 = arith.constant 3 : index
    %c0_121 = arith.constant 0 : index
    %120 = memref.load %arg0[%c3_120, %c0_121] : memref<8x8xi32, #tpu.memory_space<smem>>
    %121 = arith.index_cast %120 : i32 to index
    %c0_122 = arith.constant 0 : index
    %c0_123 = arith.constant 0 : index
    %122 = vector.load %arg1[%121, %c0_122, %c0_123] : memref<23x1x256xf32, #tpu.memory_space<vmem>>, vector<1x1x256xf32>
    %123 = vector.shape_cast %122 : vector<1x1x256xf32> to vector<1x256xf32>
    %c24 = arith.constant 24 : index
    %c0_124 = arith.constant 0 : index
    %124 = vector.load %arg6[%c24, %c0_124] : memref<64x256xf32, #tpu.memory_space<vmem>>, vector<1x256xf32>
    tpu.vector_store %arg6[%c24, %c0_124], %123 {strides = array<i32>} : memref<64x256xf32, #tpu.memory_space<vmem>>, vector<1x256xf32>,
    %c3_125 = arith.constant 3 : index
    %c1_126 = arith.constant 1 : index
    %125 = memref.load %arg0[%c3_125, %c1_126] : memref<8x8xi32, #tpu.memory_space<smem>>
    %126 = arith.index_cast %125 : i32 to index
    %c0_127 = arith.constant 0 : index
    %c0_128 = arith.constant 0 : index
    %127 = vector.load %arg1[%126, %c0_127, %c0_128] : memref<23x1x256xf32, #tpu.memory_space<vmem>>, vector<1x1x256xf32>
    %128 = vector.shape_cast %127 : vector<1x1x256xf32> to vector<1x256xf32>
    %c25 = arith.constant 25 : index
    %c0_129 = arith.constant 0 : index
    %129 = vector.load %arg6[%c25, %c0_129] : memref<64x256xf32, #tpu.memory_space<vmem>>, vector<1x256xf32>
    tpu.vector_store %arg6[%c25, %c0_129], %128 {strides = array<i32>} : memref<64x256xf32, #tpu.memory_space<vmem>>, vector<1x256xf32>,
    %c3_130 = arith.constant 3 : index
    %c2_131 = arith.constant 2 : index
    %130 = memref.load %arg0[%c3_130, %c2_131] : memref<8x8xi32, #tpu.memory_space<smem>>
    %131 = arith.index_cast %130 : i32 to index
    %c0_132 = arith.constant 0 : index
    %c0_133 = arith.constant 0 : index
    %132 = vector.load %arg1[%131, %c0_132, %c0_133] : memref<23x1x256xf32, #tpu.memory_space<vmem>>, vector<1x1x256xf32>
    %133 = vector.shape_cast %132 : vector<1x1x256xf32> to vector<1x256xf32>
    %c26 = arith.constant 26 : index
    %c0_134 = arith.constant 0 : index
    %134 = vector.load %arg6[%c26, %c0_134] : memref<64x256xf32, #tpu.memory_space<vmem>>, vector<1x256xf32>
    tpu.vector_store %arg6[%c26, %c0_134], %133 {strides = array<i32>} : memref<64x256xf32, #tpu.memory_space<vmem>>, vector<1x256xf32>,
    %c3_135 = arith.constant 3 : index
    %c3_136 = arith.constant 3 : index
    %135 = memref.load %arg0[%c3_135, %c3_136] : memref<8x8xi32, #tpu.memory_space<smem>>
    %136 = arith.index_cast %135 : i32 to index
    %c0_137 = arith.constant 0 : index
    %c0_138 = arith.constant 0 : index
    %137 = vector.load %arg1[%136, %c0_137, %c0_138] : memref<23x1x256xf32, #tpu.memory_space<vmem>>, vector<1x1x256xf32>
    %138 = vector.shape_cast %137 : vector<1x1x256xf32> to vector<1x256xf32>
    %c27 = arith.constant 27 : index
    %c0_139 = arith.constant 0 : index
    %139 = vector.load %arg6[%c27, %c0_139] : memref<64x256xf32, #tpu.memory_space<vmem>>, vector<1x256xf32>
    tpu.vector_store %arg6[%c27, %c0_139], %138 {strides = array<i32>} : memref<64x256xf32, #tpu.memory_space<vmem>>, vector<1x256xf32>,
    %c3_140 = arith.constant 3 : index
    %c4_141 = arith.constant 4 : index
    %140 = memref.load %arg0[%c3_140, %c4_141] : memref<8x8xi32, #tpu.memory_space<smem>>
    %141 = arith.index_cast %140 : i32 to index
    %c0_142 = arith.constant 0 : index
    %c0_143 = arith.constant 0 : index
    %142 = vector.load %arg1[%141, %c0_142, %c0_143] : memref<23x1x256xf32, #tpu.memory_space<vmem>>, vector<1x1x256xf32>
    %143 = vector.shape_cast %142 : vector<1x1x256xf32> to vector<1x256xf32>
    %c28 = arith.constant 28 : index
    %c0_144 = arith.constant 0 : index
    %144 = vector.load %arg6[%c28, %c0_144] : memref<64x256xf32, #tpu.memory_space<vmem>>, vector<1x256xf32>
    tpu.vector_store %arg6[%c28, %c0_144], %143 {strides = array<i32>} : memref<64x256xf32, #tpu.memory_space<vmem>>, vector<1x256xf32>,
    %c3_145 = arith.constant 3 : index
    %c5_146 = arith.constant 5 : index
    %145 = memref.load %arg0[%c3_145, %c5_146] : memref<8x8xi32, #tpu.memory_space<smem>>
    %146 = arith.index_cast %145 : i32 to index
    %c0_147 = arith.constant 0 : index
    %c0_148 = arith.constant 0 : index
    %147 = vector.load %arg1[%146, %c0_147, %c0_148] : memref<23x1x256xf32, #tpu.memory_space<vmem>>, vector<1x1x256xf32>
    %148 = vector.shape_cast %147 : vector<1x1x256xf32> to vector<1x256xf32>
    %c29 = arith.constant 29 : index
    %c0_149 = arith.constant 0 : index
    %149 = vector.load %arg6[%c29, %c0_149] : memref<64x256xf32, #tpu.memory_space<vmem>>, vector<1x256xf32>
    tpu.vector_store %arg6[%c29, %c0_149], %148 {strides = array<i32>} : memref<64x256xf32, #tpu.memory_space<vmem>>, vector<1x256xf32>,
    %c3_150 = arith.constant 3 : index
    %c6_151 = arith.constant 6 : index
    %150 = memref.load %arg0[%c3_150, %c6_151] : memref<8x8xi32, #tpu.memory_space<smem>>
    %151 = arith.index_cast %150 : i32 to index
    %c0_152 = arith.constant 0 : index
    %c0_153 = arith.constant 0 : index
    %152 = vector.load %arg1[%151, %c0_152, %c0_153] : memref<23x1x256xf32, #tpu.memory_space<vmem>>, vector<1x1x256xf32>
    %153 = vector.shape_cast %152 : vector<1x1x256xf32> to vector<1x256xf32>
    %c30 = arith.constant 30 : index
    %c0_154 = arith.constant 0 : index
    %154 = vector.load %arg6[%c30, %c0_154] : memref<64x256xf32, #tpu.memory_space<vmem>>, vector<1x256xf32>
    tpu.vector_store %arg6[%c30, %c0_154], %153 {strides = array<i32>} : memref<64x256xf32, #tpu.memory_space<vmem>>, vector<1x256xf32>,
    %c3_155 = arith.constant 3 : index
    %c7_156 = arith.constant 7 : index
    %155 = memref.load %arg0[%c3_155, %c7_156] : memref<8x8xi32, #tpu.memory_space<smem>>
    %156 = arith.index_cast %155 : i32 to index
    %c0_157 = arith.constant 0 : index
    %c0_158 = arith.constant 0 : index
    %157 = vector.load %arg1[%156, %c0_157, %c0_158] : memref<23x1x256xf32, #tpu.memory_space<vmem>>, vector<1x1x256xf32>
    %158 = vector.shape_cast %157 : vector<1x1x256xf32> to vector<1x256xf32>
    %c31 = arith.constant 31 : index
    %c0_159 = arith.constant 0 : index
    %159 = vector.load %arg6[%c31, %c0_159] : memref<64x256xf32, #tpu.memory_space<vmem>>, vector<1x256xf32>
    tpu.vector_store %arg6[%c31, %c0_159], %158 {strides = array<i32>} : memref<64x256xf32, #tpu.memory_space<vmem>>, vector<1x256xf32>,
    %c4_160 = arith.constant 4 : index
    %c0_161 = arith.constant 0 : index
    %160 = memref.load %arg0[%c4_160, %c0_161] : memref<8x8xi32, #tpu.memory_space<smem>>
    %161 = arith.index_cast %160 : i32 to index
    %c0_162 = arith.constant 0 : index
    %c0_163 = arith.constant 0 : index
    %162 = vector.load %arg1[%161, %c0_162, %c0_163] : memref<23x1x256xf32, #tpu.memory_space<vmem>>, vector<1x1x256xf32>
    %163 = vector.shape_cast %162 : vector<1x1x256xf32> to vector<1x256xf32>
    %c32 = arith.constant 32 : index
    %c0_164 = arith.constant 0 : index
    %164 = vector.load %arg6[%c32, %c0_164] : memref<64x256xf32, #tpu.memory_space<vmem>>, vector<1x256xf32>
    tpu.vector_store %arg6[%c32, %c0_164], %163 {strides = array<i32>} : memref<64x256xf32, #tpu.memory_space<vmem>>, vector<1x256xf32>,
    %c4_165 = arith.constant 4 : index
    %c1_166 = arith.constant 1 : index
    %165 = memref.load %arg0[%c4_165, %c1_166] : memref<8x8xi32, #tpu.memory_space<smem>>
    %166 = arith.index_cast %165 : i32 to index
    %c0_167 = arith.constant 0 : index
    %c0_168 = arith.constant 0 : index
    %167 = vector.load %arg1[%166, %c0_167, %c0_168] : memref<23x1x256xf32, #tpu.memory_space<vmem>>, vector<1x1x256xf32>
    %168 = vector.shape_cast %167 : vector<1x1x256xf32> to vector<1x256xf32>
    %c33 = arith.constant 33 : index
    %c0_169 = arith.constant 0 : index
    %169 = vector.load %arg6[%c33, %c0_169] : memref<64x256xf32, #tpu.memory_space<vmem>>, vector<1x256xf32>
    tpu.vector_store %arg6[%c33, %c0_169], %168 {strides = array<i32>} : memref<64x256xf32, #tpu.memory_space<vmem>>, vector<1x256xf32>,
    %c4_170 = arith.constant 4 : index
    %c2_171 = arith.constant 2 : index
    %170 = memref.load %arg0[%c4_170, %c2_171] : memref<8x8xi32, #tpu.memory_space<smem>>
    %171 = arith.index_cast %170 : i32 to index
    %c0_172 = arith.constant 0 : index
    %c0_173 = arith.constant 0 : index
    %172 = vector.load %arg1[%171, %c0_172, %c0_173] : memref<23x1x256xf32, #tpu.memory_space<vmem>>, vector<1x1x256xf32>
    %173 = vector.shape_cast %172 : vector<1x1x256xf32> to vector<1x256xf32>
    %c34 = arith.constant 34 : index
    %c0_174 = arith.constant 0 : index
    %174 = vector.load %arg6[%c34, %c0_174] : memref<64x256xf32, #tpu.memory_space<vmem>>, vector<1x256xf32>
    tpu.vector_store %arg6[%c34, %c0_174], %173 {strides = array<i32>} : memref<64x256xf32, #tpu.memory_space<vmem>>, vector<1x256xf32>,
    %c4_175 = arith.constant 4 : index
    %c3_176 = arith.constant 3 : index
    %175 = memref.load %arg0[%c4_175, %c3_176] : memref<8x8xi32, #tpu.memory_space<smem>>
    %176 = arith.index_cast %175 : i32 to index
    %c0_177 = arith.constant 0 : index
    %c0_178 = arith.constant 0 : index
    %177 = vector.load %arg1[%176, %c0_177, %c0_178] : memref<23x1x256xf32, #tpu.memory_space<vmem>>, vector<1x1x256xf32>
    %178 = vector.shape_cast %177 : vector<1x1x256xf32> to vector<1x256xf32>
    %c35 = arith.constant 35 : index
    %c0_179 = arith.constant 0 : index
    %179 = vector.load %arg6[%c35, %c0_179] : memref<64x256xf32, #tpu.memory_space<vmem>>, vector<1x256xf32>
    tpu.vector_store %arg6[%c35, %c0_179], %178 {strides = array<i32>} : memref<64x256xf32, #tpu.memory_space<vmem>>, vector<1x256xf32>,
    %c4_180 = arith.constant 4 : index
    %c4_181 = arith.constant 4 : index
    %180 = memref.load %arg0[%c4_180, %c4_181] : memref<8x8xi32, #tpu.memory_space<smem>>
    %181 = arith.index_cast %180 : i32 to index
    %c0_182 = arith.constant 0 : index
    %c0_183 = arith.constant 0 : index
    %182 = vector.load %arg1[%181, %c0_182, %c0_183] : memref<23x1x256xf32, #tpu.memory_space<vmem>>, vector<1x1x256xf32>
    %183 = vector.shape_cast %182 : vector<1x1x256xf32> to vector<1x256xf32>
    %c36 = arith.constant 36 : index
    %c0_184 = arith.constant 0 : index
    %184 = vector.load %arg6[%c36, %c0_184] : memref<64x256xf32, #tpu.memory_space<vmem>>, vector<1x256xf32>
    tpu.vector_store %arg6[%c36, %c0_184], %183 {strides = array<i32>} : memref<64x256xf32, #tpu.memory_space<vmem>>, vector<1x256xf32>,
    %c4_185 = arith.constant 4 : index
    %c5_186 = arith.constant 5 : index
    %185 = memref.load %arg0[%c4_185, %c5_186] : memref<8x8xi32, #tpu.memory_space<smem>>
    %186 = arith.index_cast %185 : i32 to index
    %c0_187 = arith.constant 0 : index
    %c0_188 = arith.constant 0 : index
    %187 = vector.load %arg1[%186, %c0_187, %c0_188] : memref<23x1x256xf32, #tpu.memory_space<vmem>>, vector<1x1x256xf32>
    %188 = vector.shape_cast %187 : vector<1x1x256xf32> to vector<1x256xf32>
    %c37 = arith.constant 37 : index
    %c0_189 = arith.constant 0 : index
    %189 = vector.load %arg6[%c37, %c0_189] : memref<64x256xf32, #tpu.memory_space<vmem>>, vector<1x256xf32>
    tpu.vector_store %arg6[%c37, %c0_189], %188 {strides = array<i32>} : memref<64x256xf32, #tpu.memory_space<vmem>>, vector<1x256xf32>,
    %c4_190 = arith.constant 4 : index
    %c6_191 = arith.constant 6 : index
    %190 = memref.load %arg0[%c4_190, %c6_191] : memref<8x8xi32, #tpu.memory_space<smem>>
    %191 = arith.index_cast %190 : i32 to index
    %c0_192 = arith.constant 0 : index
    %c0_193 = arith.constant 0 : index
    %192 = vector.load %arg1[%191, %c0_192, %c0_193] : memref<23x1x256xf32, #tpu.memory_space<vmem>>, vector<1x1x256xf32>
    %193 = vector.shape_cast %192 : vector<1x1x256xf32> to vector<1x256xf32>
    %c38 = arith.constant 38 : index
    %c0_194 = arith.constant 0 : index
    %194 = vector.load %arg6[%c38, %c0_194] : memref<64x256xf32, #tpu.memory_space<vmem>>, vector<1x256xf32>
    tpu.vector_store %arg6[%c38, %c0_194], %193 {strides = array<i32>} : memref<64x256xf32, #tpu.memory_space<vmem>>, vector<1x256xf32>,
    %c4_195 = arith.constant 4 : index
    %c7_196 = arith.constant 7 : index
    %195 = memref.load %arg0[%c4_195, %c7_196] : memref<8x8xi32, #tpu.memory_space<smem>>
    %196 = arith.index_cast %195 : i32 to index
    %c0_197 = arith.constant 0 : index
    %c0_198 = arith.constant 0 : index
    %197 = vector.load %arg1[%196, %c0_197, %c0_198] : memref<23x1x256xf32, #tpu.memory_space<vmem>>, vector<1x1x256xf32>
    %198 = vector.shape_cast %197 : vector<1x1x256xf32> to vector<1x256xf32>
    %c39 = arith.constant 39 : index
    %c0_199 = arith.constant 0 : index
    %199 = vector.load %arg6[%c39, %c0_199] : memref<64x256xf32, #tpu.memory_space<vmem>>, vector<1x256xf32>
    tpu.vector_store %arg6[%c39, %c0_199], %198 {strides = array<i32>} : memref<64x256xf32, #tpu.memory_space<vmem>>, vector<1x256xf32>,
    %c5_200 = arith.constant 5 : index
    %c0_201 = arith.constant 0 : index
    %200 = memref.load %arg0[%c5_200, %c0_201] : memref<8x8xi32, #tpu.memory_space<smem>>
    %201 = arith.index_cast %200 : i32 to index
    %c0_202 = arith.constant 0 : index
    %c0_203 = arith.constant 0 : index
    %202 = vector.load %arg1[%201, %c0_202, %c0_203] : memref<23x1x256xf32, #tpu.memory_space<vmem>>, vector<1x1x256xf32>
    %203 = vector.shape_cast %202 : vector<1x1x256xf32> to vector<1x256xf32>
    %c40 = arith.constant 40 : index
    %c0_204 = arith.constant 0 : index
    %204 = vector.load %arg6[%c40, %c0_204] : memref<64x256xf32, #tpu.memory_space<vmem>>, vector<1x256xf32>
    tpu.vector_store %arg6[%c40, %c0_204], %203 {strides = array<i32>} : memref<64x256xf32, #tpu.memory_space<vmem>>, vector<1x256xf32>,
    %c5_205 = arith.constant 5 : index
    %c1_206 = arith.constant 1 : index
    %205 = memref.load %arg0[%c5_205, %c1_206] : memref<8x8xi32, #tpu.memory_space<smem>>
    %206 = arith.index_cast %205 : i32 to index
    %c0_207 = arith.constant 0 : index
    %c0_208 = arith.constant 0 : index
    %207 = vector.load %arg1[%206, %c0_207, %c0_208] : memref<23x1x256xf32, #tpu.memory_space<vmem>>, vector<1x1x256xf32>
    %208 = vector.shape_cast %207 : vector<1x1x256xf32> to vector<1x256xf32>
    %c41 = arith.constant 41 : index
    %c0_209 = arith.constant 0 : index
    %209 = vector.load %arg6[%c41, %c0_209] : memref<64x256xf32, #tpu.memory_space<vmem>>, vector<1x256xf32>
    tpu.vector_store %arg6[%c41, %c0_209], %208 {strides = array<i32>} : memref<64x256xf32, #tpu.memory_space<vmem>>, vector<1x256xf32>,
    %c5_210 = arith.constant 5 : index
    %c2_211 = arith.constant 2 : index
    %210 = memref.load %arg0[%c5_210, %c2_211] : memref<8x8xi32, #tpu.memory_space<smem>>
    %211 = arith.index_cast %210 : i32 to index
    %c0_212 = arith.constant 0 : index
    %c0_213 = arith.constant 0 : index
    %212 = vector.load %arg1[%211, %c0_212, %c0_213] : memref<23x1x256xf32, #tpu.memory_space<vmem>>, vector<1x1x256xf32>
    %213 = vector.shape_cast %212 : vector<1x1x256xf32> to vector<1x256xf32>
    %c42 = arith.constant 42 : index
    %c0_214 = arith.constant 0 : index
    %214 = vector.load %arg6[%c42, %c0_214] : memref<64x256xf32, #tpu.memory_space<vmem>>, vector<1x256xf32>
    tpu.vector_store %arg6[%c42, %c0_214], %213 {strides = array<i32>} : memref<64x256xf32, #tpu.memory_space<vmem>>, vector<1x256xf32>,
    %c5_215 = arith.constant 5 : index
    %c3_216 = arith.constant 3 : index
    %215 = memref.load %arg0[%c5_215, %c3_216] : memref<8x8xi32, #tpu.memory_space<smem>>
    %216 = arith.index_cast %215 : i32 to index
    %c0_217 = arith.constant 0 : index
    %c0_218 = arith.constant 0 : index
    %217 = vector.load %arg1[%216, %c0_217, %c0_218] : memref<23x1x256xf32, #tpu.memory_space<vmem>>, vector<1x1x256xf32>
    %218 = vector.shape_cast %217 : vector<1x1x256xf32> to vector<1x256xf32>
    %c43 = arith.constant 43 : index
    %c0_219 = arith.constant 0 : index
    %219 = vector.load %arg6[%c43, %c0_219] : memref<64x256xf32, #tpu.memory_space<vmem>>, vector<1x256xf32>
    tpu.vector_store %arg6[%c43, %c0_219], %218 {strides = array<i32>} : memref<64x256xf32, #tpu.memory_space<vmem>>, vector<1x256xf32>,
    %c5_220 = arith.constant 5 : index
    %c4_221 = arith.constant 4 : index
    %220 = memref.load %arg0[%c5_220, %c4_221] : memref<8x8xi32, #tpu.memory_space<smem>>
    %221 = arith.index_cast %220 : i32 to index
    %c0_222 = arith.constant 0 : index
    %c0_223 = arith.constant 0 : index
    %222 = vector.load %arg1[%221, %c0_222, %c0_223] : memref<23x1x256xf32, #tpu.memory_space<vmem>>, vector<1x1x256xf32>
    %223 = vector.shape_cast %222 : vector<1x1x256xf32> to vector<1x256xf32>
    %c44 = arith.constant 44 : index
    %c0_224 = arith.constant 0 : index
    %224 = vector.load %arg6[%c44, %c0_224] : memref<64x256xf32, #tpu.memory_space<vmem>>, vector<1x256xf32>
    tpu.vector_store %arg6[%c44, %c0_224], %223 {strides = array<i32>} : memref<64x256xf32, #tpu.memory_space<vmem>>, vector<1x256xf32>,
    %c5_225 = arith.constant 5 : index
    %c5_226 = arith.constant 5 : index
    %225 = memref.load %arg0[%c5_225, %c5_226] : memref<8x8xi32, #tpu.memory_space<smem>>
    %226 = arith.index_cast %225 : i32 to index
    %c0_227 = arith.constant 0 : index
    %c0_228 = arith.constant 0 : index
    %227 = vector.load %arg1[%226, %c0_227, %c0_228] : memref<23x1x256xf32, #tpu.memory_space<vmem>>, vector<1x1x256xf32>
    %228 = vector.shape_cast %227 : vector<1x1x256xf32> to vector<1x256xf32>
    %c45 = arith.constant 45 : index
    %c0_229 = arith.constant 0 : index
    %229 = vector.load %arg6[%c45, %c0_229] : memref<64x256xf32, #tpu.memory_space<vmem>>, vector<1x256xf32>
    tpu.vector_store %arg6[%c45, %c0_229], %228 {strides = array<i32>} : memref<64x256xf32, #tpu.memory_space<vmem>>, vector<1x256xf32>,
    %c5_230 = arith.constant 5 : index
    %c6_231 = arith.constant 6 : index
    %230 = memref.load %arg0[%c5_230, %c6_231] : memref<8x8xi32, #tpu.memory_space<smem>>
    %231 = arith.index_cast %230 : i32 to index
    %c0_232 = arith.constant 0 : index
    %c0_233 = arith.constant 0 : index
    %232 = vector.load %arg1[%231, %c0_232, %c0_233] : memref<23x1x256xf32, #tpu.memory_space<vmem>>, vector<1x1x256xf32>
    %233 = vector.shape_cast %232 : vector<1x1x256xf32> to vector<1x256xf32>
    %c46 = arith.constant 46 : index
    %c0_234 = arith.constant 0 : index
    %234 = vector.load %arg6[%c46, %c0_234] : memref<64x256xf32, #tpu.memory_space<vmem>>, vector<1x256xf32>
    tpu.vector_store %arg6[%c46, %c0_234], %233 {strides = array<i32>} : memref<64x256xf32, #tpu.memory_space<vmem>>, vector<1x256xf32>,
    %c5_235 = arith.constant 5 : index
    %c7_236 = arith.constant 7 : index
    %235 = memref.load %arg0[%c5_235, %c7_236] : memref<8x8xi32, #tpu.memory_space<smem>>
    %236 = arith.index_cast %235 : i32 to index
    %c0_237 = arith.constant 0 : index
    %c0_238 = arith.constant 0 : index
    %237 = vector.load %arg1[%236, %c0_237, %c0_238] : memref<23x1x256xf32, #tpu.memory_space<vmem>>, vector<1x1x256xf32>
    %238 = vector.shape_cast %237 : vector<1x1x256xf32> to vector<1x256xf32>
    %c47 = arith.constant 47 : index
    %c0_239 = arith.constant 0 : index
    %239 = vector.load %arg6[%c47, %c0_239] : memref<64x256xf32, #tpu.memory_space<vmem>>, vector<1x256xf32>
    tpu.vector_store %arg6[%c47, %c0_239], %238 {strides = array<i32>} : memref<64x256xf32, #tpu.memory_space<vmem>>, vector<1x256xf32>,
    %c6_240 = arith.constant 6 : index
    %c0_241 = arith.constant 0 : index
    %240 = memref.load %arg0[%c6_240, %c0_241] : memref<8x8xi32, #tpu.memory_space<smem>>
    %241 = arith.index_cast %240 : i32 to index
    %c0_242 = arith.constant 0 : index
    %c0_243 = arith.constant 0 : index
    %242 = vector.load %arg1[%241, %c0_242, %c0_243] : memref<23x1x256xf32, #tpu.memory_space<vmem>>, vector<1x1x256xf32>
    %243 = vector.shape_cast %242 : vector<1x1x256xf32> to vector<1x256xf32>
    %c48 = arith.constant 48 : index
    %c0_244 = arith.constant 0 : index
    %244 = vector.load %arg6[%c48, %c0_244] : memref<64x256xf32, #tpu.memory_space<vmem>>, vector<1x256xf32>
    tpu.vector_store %arg6[%c48, %c0_244], %243 {strides = array<i32>} : memref<64x256xf32, #tpu.memory_space<vmem>>, vector<1x256xf32>,
    %c6_245 = arith.constant 6 : index
    %c1_246 = arith.constant 1 : index
    %245 = memref.load %arg0[%c6_245, %c1_246] : memref<8x8xi32, #tpu.memory_space<smem>>
    %246 = arith.index_cast %245 : i32 to index
    %c0_247 = arith.constant 0 : index
    %c0_248 = arith.constant 0 : index
    %247 = vector.load %arg1[%246, %c0_247, %c0_248] : memref<23x1x256xf32, #tpu.memory_space<vmem>>, vector<1x1x256xf32>
    %248 = vector.shape_cast %247 : vector<1x1x256xf32> to vector<1x256xf32>
    %c49 = arith.constant 49 : index
    %c0_249 = arith.constant 0 : index
    %249 = vector.load %arg6[%c49, %c0_249] : memref<64x256xf32, #tpu.memory_space<vmem>>, vector<1x256xf32>
    tpu.vector_store %arg6[%c49, %c0_249], %248 {strides = array<i32>} : memref<64x256xf32, #tpu.memory_space<vmem>>, vector<1x256xf32>,
    %c6_250 = arith.constant 6 : index
    %c2_251 = arith.constant 2 : index
    %250 = memref.load %arg0[%c6_250, %c2_251] : memref<8x8xi32, #tpu.memory_space<smem>>
    %251 = arith.index_cast %250 : i32 to index
    %c0_252 = arith.constant 0 : index
    %c0_253 = arith.constant 0 : index
    %252 = vector.load %arg1[%251, %c0_252, %c0_253] : memref<23x1x256xf32, #tpu.memory_space<vmem>>, vector<1x1x256xf32>
    %253 = vector.shape_cast %252 : vector<1x1x256xf32> to vector<1x256xf32>
    %c50 = arith.constant 50 : index
    %c0_254 = arith.constant 0 : index
    %254 = vector.load %arg6[%c50, %c0_254] : memref<64x256xf32, #tpu.memory_space<vmem>>, vector<1x256xf32>
    tpu.vector_store %arg6[%c50, %c0_254], %253 {strides = array<i32>} : memref<64x256xf32, #tpu.memory_space<vmem>>, vector<1x256xf32>,
    %c6_255 = arith.constant 6 : index
    %c3_256 = arith.constant 3 : index
    %255 = memref.load %arg0[%c6_255, %c3_256] : memref<8x8xi32, #tpu.memory_space<smem>>
    %256 = arith.index_cast %255 : i32 to index
    %c0_257 = arith.constant 0 : index
    %c0_258 = arith.constant 0 : index
    %257 = vector.load %arg1[%256, %c0_257, %c0_258] : memref<23x1x256xf32, #tpu.memory_space<vmem>>, vector<1x1x256xf32>
    %258 = vector.shape_cast %257 : vector<1x1x256xf32> to vector<1x256xf32>
    %c51 = arith.constant 51 : index
    %c0_259 = arith.constant 0 : index
    %259 = vector.load %arg6[%c51, %c0_259] : memref<64x256xf32, #tpu.memory_space<vmem>>, vector<1x256xf32>
    tpu.vector_store %arg6[%c51, %c0_259], %258 {strides = array<i32>} : memref<64x256xf32, #tpu.memory_space<vmem>>, vector<1x256xf32>,
    %c6_260 = arith.constant 6 : index
    %c4_261 = arith.constant 4 : index
    %260 = memref.load %arg0[%c6_260, %c4_261] : memref<8x8xi32, #tpu.memory_space<smem>>
    %261 = arith.index_cast %260 : i32 to index
    %c0_262 = arith.constant 0 : index
    %c0_263 = arith.constant 0 : index
    %262 = vector.load %arg1[%261, %c0_262, %c0_263] : memref<23x1x256xf32, #tpu.memory_space<vmem>>, vector<1x1x256xf32>
    %263 = vector.shape_cast %262 : vector<1x1x256xf32> to vector<1x256xf32>
    %c52 = arith.constant 52 : index
    %c0_264 = arith.constant 0 : index
    %264 = vector.load %arg6[%c52, %c0_264] : memref<64x256xf32, #tpu.memory_space<vmem>>, vector<1x256xf32>
    tpu.vector_store %arg6[%c52, %c0_264], %263 {strides = array<i32>} : memref<64x256xf32, #tpu.memory_space<vmem>>, vector<1x256xf32>,
    %c6_265 = arith.constant 6 : index
    %c5_266 = arith.constant 5 : index
    %265 = memref.load %arg0[%c6_265, %c5_266] : memref<8x8xi32, #tpu.memory_space<smem>>
    %266 = arith.index_cast %265 : i32 to index
    %c0_267 = arith.constant 0 : index
    %c0_268 = arith.constant 0 : index
    %267 = vector.load %arg1[%266, %c0_267, %c0_268] : memref<23x1x256xf32, #tpu.memory_space<vmem>>, vector<1x1x256xf32>
    %268 = vector.shape_cast %267 : vector<1x1x256xf32> to vector<1x256xf32>
    %c53 = arith.constant 53 : index
    %c0_269 = arith.constant 0 : index
    %269 = vector.load %arg6[%c53, %c0_269] : memref<64x256xf32, #tpu.memory_space<vmem>>, vector<1x256xf32>
    tpu.vector_store %arg6[%c53, %c0_269], %268 {strides = array<i32>} : memref<64x256xf32, #tpu.memory_space<vmem>>, vector<1x256xf32>,
    %c6_270 = arith.constant 6 : index
    %c6_271 = arith.constant 6 : index
    %270 = memref.load %arg0[%c6_270, %c6_271] : memref<8x8xi32, #tpu.memory_space<smem>>
    %271 = arith.index_cast %270 : i32 to index
    %c0_272 = arith.constant 0 : index
    %c0_273 = arith.constant 0 : index
    %272 = vector.load %arg1[%271, %c0_272, %c0_273] : memref<23x1x256xf32, #tpu.memory_space<vmem>>, vector<1x1x256xf32>
    %273 = vector.shape_cast %272 : vector<1x1x256xf32> to vector<1x256xf32>
    %c54 = arith.constant 54 : index
    %c0_274 = arith.constant 0 : index
    %274 = vector.load %arg6[%c54, %c0_274] : memref<64x256xf32, #tpu.memory_space<vmem>>, vector<1x256xf32>
    tpu.vector_store %arg6[%c54, %c0_274], %273 {strides = array<i32>} : memref<64x256xf32, #tpu.memory_space<vmem>>, vector<1x256xf32>,
    %c6_275 = arith.constant 6 : index
    %c7_276 = arith.constant 7 : index
    %275 = memref.load %arg0[%c6_275, %c7_276] : memref<8x8xi32, #tpu.memory_space<smem>>
    %276 = arith.index_cast %275 : i32 to index
    %c0_277 = arith.constant 0 : index
    %c0_278 = arith.constant 0 : index
    %277 = vector.load %arg1[%276, %c0_277, %c0_278] : memref<23x1x256xf32, #tpu.memory_space<vmem>>, vector<1x1x256xf32>
    %278 = vector.shape_cast %277 : vector<1x1x256xf32> to vector<1x256xf32>
    %c55 = arith.constant 55 : index
    %c0_279 = arith.constant 0 : index
    %279 = vector.load %arg6[%c55, %c0_279] : memref<64x256xf32, #tpu.memory_space<vmem>>, vector<1x256xf32>
    tpu.vector_store %arg6[%c55, %c0_279], %278 {strides = array<i32>} : memref<64x256xf32, #tpu.memory_space<vmem>>, vector<1x256xf32>,
    %c7_280 = arith.constant 7 : index
    %c0_281 = arith.constant 0 : index
    %280 = memref.load %arg0[%c7_280, %c0_281] : memref<8x8xi32, #tpu.memory_space<smem>>
    %281 = arith.index_cast %280 : i32 to index
    %c0_282 = arith.constant 0 : index
    %c0_283 = arith.constant 0 : index
    %282 = vector.load %arg1[%281, %c0_282, %c0_283] : memref<23x1x256xf32, #tpu.memory_space<vmem>>, vector<1x1x256xf32>
    %283 = vector.shape_cast %282 : vector<1x1x256xf32> to vector<1x256xf32>
    %c56 = arith.constant 56 : index
    %c0_284 = arith.constant 0 : index
    %284 = vector.load %arg6[%c56, %c0_284] : memref<64x256xf32, #tpu.memory_space<vmem>>, vector<1x256xf32>
    tpu.vector_store %arg6[%c56, %c0_284], %283 {strides = array<i32>} : memref<64x256xf32, #tpu.memory_space<vmem>>, vector<1x256xf32>,
    %c7_285 = arith.constant 7 : index
    %c1_286 = arith.constant 1 : index
    %285 = memref.load %arg0[%c7_285, %c1_286] : memref<8x8xi32, #tpu.memory_space<smem>>
    %286 = arith.index_cast %285 : i32 to index
    %c0_287 = arith.constant 0 : index
    %c0_288 = arith.constant 0 : index
    %287 = vector.load %arg1[%286, %c0_287, %c0_288] : memref<23x1x256xf32, #tpu.memory_space<vmem>>, vector<1x1x256xf32>
    %288 = vector.shape_cast %287 : vector<1x1x256xf32> to vector<1x256xf32>
    %c57 = arith.constant 57 : index
    %c0_289 = arith.constant 0 : index
    %289 = vector.load %arg6[%c57, %c0_289] : memref<64x256xf32, #tpu.memory_space<vmem>>, vector<1x256xf32>
    tpu.vector_store %arg6[%c57, %c0_289], %288 {strides = array<i32>} : memref<64x256xf32, #tpu.memory_space<vmem>>, vector<1x256xf32>,
    %c7_290 = arith.constant 7 : index
    %c2_291 = arith.constant 2 : index
    %290 = memref.load %arg0[%c7_290, %c2_291] : memref<8x8xi32, #tpu.memory_space<smem>>
    %291 = arith.index_cast %290 : i32 to index
    %c0_292 = arith.constant 0 : index
    %c0_293 = arith.constant 0 : index
    %292 = vector.load %arg1[%291, %c0_292, %c0_293] : memref<23x1x256xf32, #tpu.memory_space<vmem>>, vector<1x1x256xf32>
    %293 = vector.shape_cast %292 : vector<1x1x256xf32> to vector<1x256xf32>
    %c58 = arith.constant 58 : index
    %c0_294 = arith.constant 0 : index
    %294 = vector.load %arg6[%c58, %c0_294] : memref<64x256xf32, #tpu.memory_space<vmem>>, vector<1x256xf32>
    tpu.vector_store %arg6[%c58, %c0_294], %293 {strides = array<i32>} : memref<64x256xf32, #tpu.memory_space<vmem>>, vector<1x256xf32>,
    %c7_295 = arith.constant 7 : index
    %c3_296 = arith.constant 3 : index
    %295 = memref.load %arg0[%c7_295, %c3_296] : memref<8x8xi32, #tpu.memory_space<smem>>
    %296 = arith.index_cast %295 : i32 to index
    %c0_297 = arith.constant 0 : index
    %c0_298 = arith.constant 0 : index
    %297 = vector.load %arg1[%296, %c0_297, %c0_298] : memref<23x1x256xf32, #tpu.memory_space<vmem>>, vector<1x1x256xf32>
    %298 = vector.shape_cast %297 : vector<1x1x256xf32> to vector<1x256xf32>
    %c59 = arith.constant 59 : index
    %c0_299 = arith.constant 0 : index
    %299 = vector.load %arg6[%c59, %c0_299] : memref<64x256xf32, #tpu.memory_space<vmem>>, vector<1x256xf32>
    tpu.vector_store %arg6[%c59, %c0_299], %298 {strides = array<i32>} : memref<64x256xf32, #tpu.memory_space<vmem>>, vector<1x256xf32>,
    %c7_300 = arith.constant 7 : index
    %c4_301 = arith.constant 4 : index
    %300 = memref.load %arg0[%c7_300, %c4_301] : memref<8x8xi32, #tpu.memory_space<smem>>
    %301 = arith.index_cast %300 : i32 to index
    %c0_302 = arith.constant 0 : index
    %c0_303 = arith.constant 0 : index
    %302 = vector.load %arg1[%301, %c0_302, %c0_303] : memref<23x1x256xf32, #tpu.memory_space<vmem>>, vector<1x1x256xf32>
    %303 = vector.shape_cast %302 : vector<1x1x256xf32> to vector<1x256xf32>
    %c60 = arith.constant 60 : index
    %c0_304 = arith.constant 0 : index
    %304 = vector.load %arg6[%c60, %c0_304] : memref<64x256xf32, #tpu.memory_space<vmem>>, vector<1x256xf32>
    tpu.vector_store %arg6[%c60, %c0_304], %303 {strides = array<i32>} : memref<64x256xf32, #tpu.memory_space<vmem>>, vector<1x256xf32>,
    %c7_305 = arith.constant 7 : index
    %c5_306 = arith.constant 5 : index
    %305 = memref.load %arg0[%c7_305, %c5_306] : memref<8x8xi32, #tpu.memory_space<smem>>
    %306 = arith.index_cast %305 : i32 to index
    %c0_307 = arith.constant 0 : index
    %c0_308 = arith.constant 0 : index
    %307 = vector.load %arg1[%306, %c0_307, %c0_308] : memref<23x1x256xf32, #tpu.memory_space<vmem>>, vector<1x1x256xf32>
    %308 = vector.shape_cast %307 : vector<1x1x256xf32> to vector<1x256xf32>
    %c61 = arith.constant 61 : index
    %c0_309 = arith.constant 0 : index
    %309 = vector.load %arg6[%c61, %c0_309] : memref<64x256xf32, #tpu.memory_space<vmem>>, vector<1x256xf32>
    tpu.vector_store %arg6[%c61, %c0_309], %308 {strides = array<i32>} : memref<64x256xf32, #tpu.memory_space<vmem>>, vector<1x256xf32>,
    %c7_310 = arith.constant 7 : index
    %c6_311 = arith.constant 6 : index
    %310 = memref.load %arg0[%c7_310, %c6_311] : memref<8x8xi32, #tpu.memory_space<smem>>
    %311 = arith.index_cast %310 : i32 to index
    %c0_312 = arith.constant 0 : index
    %c0_313 = arith.constant 0 : index
    %312 = vector.load %arg1[%311, %c0_312, %c0_313] : memref<23x1x256xf32, #tpu.memory_space<vmem>>, vector<1x1x256xf32>
    %313 = vector.shape_cast %312 : vector<1x1x256xf32> to vector<1x256xf32>
    %c62 = arith.constant 62 : index
    %c0_314 = arith.constant 0 : index
    %314 = vector.load %arg6[%c62, %c0_314] : memref<64x256xf32, #tpu.memory_space<vmem>>, vector<1x256xf32>
    tpu.vector_store %arg6[%c62, %c0_314], %313 {strides = array<i32>} : memref<64x256xf32, #tpu.memory_space<vmem>>, vector<1x256xf32>,
    %c7_315 = arith.constant 7 : index
    %c7_316 = arith.constant 7 : index
    %315 = memref.load %arg0[%c7_315, %c7_316] : memref<8x8xi32, #tpu.memory_space<smem>>
    %316 = arith.index_cast %315 : i32 to index
    %c0_317 = arith.constant 0 : index
    %c0_318 = arith.constant 0 : index
    %317 = vector.load %arg1[%316, %c0_317, %c0_318] : memref<23x1x256xf32, #tpu.memory_space<vmem>>, vector<1x1x256xf32>
    %318 = vector.shape_cast %317 : vector<1x1x256xf32> to vector<1x256xf32>
    %c63 = arith.constant 63 : index
    %c0_319 = arith.constant 0 : index
    %319 = vector.load %arg6[%c63, %c0_319] : memref<64x256xf32, #tpu.memory_space<vmem>>, vector<1x256xf32>
    tpu.vector_store %arg6[%c63, %c0_319], %318 {strides = array<i32>} : memref<64x256xf32, #tpu.memory_space<vmem>>, vector<1x256xf32>,
    %c0_320 = arith.constant 0 : index
    %c0_321 = arith.constant 0 : index
    %320 = vector.load %arg6[%c0_320, %c0_321] : memref<64x256xf32, #tpu.memory_space<vmem>>, vector<8x256xf32>
    %321 = math.tanh %320 : vector<8x256xf32>
    %322 = arith.truncf %321 : vector<8x256xf32> to vector<8x256xbf16>
    %c0_322 = arith.constant 0 : index
    %c0_323 = arith.constant 0 : index
    %323 = vector.load %arg2[%c0_322, %c0_323] : memref<256x256xbf16, #tpu.memory_space<vmem>>, vector<256x256xbf16>
    %cst = arith.constant dense<0.000000e+00> : vector<8x256xf32>
    %324 = tpu.matmul %322, %323, %cst {dimension_numbers = #tpu.dot_dimension_numbers<[1], [0], [0], [1], [0, 0, 1, 1], [], []>} : vector<8x256xbf16>, vector<256x256xbf16>, vector<8x256xf32> -> vector<8x256xf32>
    %c8_324 = arith.constant 8 : index
    %c0_325 = arith.constant 0 : index
    %325 = vector.load %arg6[%c8_324, %c0_325] : memref<64x256xf32, #tpu.memory_space<vmem>>, vector<8x256xf32>
    %326 = arith.addf %325, %324 : vector<8x256xf32>
    %327 = math.tanh %326 : vector<8x256xf32>
    %328 = arith.truncf %327 : vector<8x256xf32> to vector<8x256xbf16>
    %c0_326 = arith.constant 0 : index
    %c0_327 = arith.constant 0 : index
    %329 = vector.load %arg2[%c0_326, %c0_327] : memref<256x256xbf16, #tpu.memory_space<vmem>>, vector<256x256xbf16>
    %cst_328 = arith.constant dense<0.000000e+00> : vector<8x256xf32>
    %330 = tpu.matmul %328, %329, %cst_328 {dimension_numbers = #tpu.dot_dimension_numbers<[1], [0], [0], [1], [0, 0, 1, 1], [], []>} : vector<8x256xbf16>, vector<256x256xbf16>, vector<8x256xf32> -> vector<8x256xf32>
    %c16_329 = arith.constant 16 : index
    %c0_330 = arith.constant 0 : index
    %331 = vector.load %arg6[%c16_329, %c0_330] : memref<64x256xf32, #tpu.memory_space<vmem>>, vector<8x256xf32>
    %332 = arith.addf %331, %330 : vector<8x256xf32>
    %333 = math.tanh %332 : vector<8x256xf32>
    %334 = arith.truncf %333 : vector<8x256xf32> to vector<8x256xbf16>
    %c0_331 = arith.constant 0 : index
    %c0_332 = arith.constant 0 : index
    %335 = vector.load %arg2[%c0_331, %c0_332] : memref<256x256xbf16, #tpu.memory_space<vmem>>, vector<256x256xbf16>
    %cst_333 = arith.constant dense<0.000000e+00> : vector<8x256xf32>
    %336 = tpu.matmul %334, %335, %cst_333 {dimension_numbers = #tpu.dot_dimension_numbers<[1], [0], [0], [1], [0, 0, 1, 1], [], []>} : vector<8x256xbf16>, vector<256x256xbf16>, vector<8x256xf32> -> vector<8x256xf32>
    %c24_334 = arith.constant 24 : index
    %c0_335 = arith.constant 0 : index
    %337 = vector.load %arg6[%c24_334, %c0_335] : memref<64x256xf32, #tpu.memory_space<vmem>>, vector<8x256xf32>
    %338 = arith.addf %337, %336 : vector<8x256xf32>
    %339 = math.tanh %338 : vector<8x256xf32>
    %340 = arith.truncf %339 : vector<8x256xf32> to vector<8x256xbf16>
    %c0_336 = arith.constant 0 : index
    %c0_337 = arith.constant 0 : index
    %341 = vector.load %arg2[%c0_336, %c0_337] : memref<256x256xbf16, #tpu.memory_space<vmem>>, vector<256x256xbf16>
    %cst_338 = arith.constant dense<0.000000e+00> : vector<8x256xf32>
    %342 = tpu.matmul %340, %341, %cst_338 {dimension_numbers = #tpu.dot_dimension_numbers<[1], [0], [0], [1], [0, 0, 1, 1], [], []>} : vector<8x256xbf16>, vector<256x256xbf16>, vector<8x256xf32> -> vector<8x256xf32>
    %c32_339 = arith.constant 32 : index
    %c0_340 = arith.constant 0 : index
    %343 = vector.load %arg6[%c32_339, %c0_340] : memref<64x256xf32, #tpu.memory_space<vmem>>, vector<8x256xf32>
    %344 = arith.addf %343, %342 : vector<8x256xf32>
    %345 = math.tanh %344 : vector<8x256xf32>
    %346 = arith.truncf %345 : vector<8x256xf32> to vector<8x256xbf16>
    %c0_341 = arith.constant 0 : index
    %c0_342 = arith.constant 0 : index
    %347 = vector.load %arg2[%c0_341, %c0_342] : memref<256x256xbf16, #tpu.memory_space<vmem>>, vector<256x256xbf16>
    %cst_343 = arith.constant dense<0.000000e+00> : vector<8x256xf32>
    %348 = tpu.matmul %346, %347, %cst_343 {dimension_numbers = #tpu.dot_dimension_numbers<[1], [0], [0], [1], [0, 0, 1, 1], [], []>} : vector<8x256xbf16>, vector<256x256xbf16>, vector<8x256xf32> -> vector<8x256xf32>
    %c40_344 = arith.constant 40 : index
    %c0_345 = arith.constant 0 : index
    %349 = vector.load %arg6[%c40_344, %c0_345] : memref<64x256xf32, #tpu.memory_space<vmem>>, vector<8x256xf32>
    %350 = arith.addf %349, %348 : vector<8x256xf32>
    %351 = math.tanh %350 : vector<8x256xf32>
    %352 = arith.truncf %351 : vector<8x256xf32> to vector<8x256xbf16>
    %c0_346 = arith.constant 0 : index
    %c0_347 = arith.constant 0 : index
    %353 = vector.load %arg2[%c0_346, %c0_347] : memref<256x256xbf16, #tpu.memory_space<vmem>>, vector<256x256xbf16>
    %cst_348 = arith.constant dense<0.000000e+00> : vector<8x256xf32>
    %354 = tpu.matmul %352, %353, %cst_348 {dimension_numbers = #tpu.dot_dimension_numbers<[1], [0], [0], [1], [0, 0, 1, 1], [], []>} : vector<8x256xbf16>, vector<256x256xbf16>, vector<8x256xf32> -> vector<8x256xf32>
    %c48_349 = arith.constant 48 : index
    %c0_350 = arith.constant 0 : index
    %355 = vector.load %arg6[%c48_349, %c0_350] : memref<64x256xf32, #tpu.memory_space<vmem>>, vector<8x256xf32>
    %356 = arith.addf %355, %354 : vector<8x256xf32>
    %357 = math.tanh %356 : vector<8x256xf32>
    %358 = arith.truncf %357 : vector<8x256xf32> to vector<8x256xbf16>
    %c0_351 = arith.constant 0 : index
    %c0_352 = arith.constant 0 : index
    %359 = vector.load %arg2[%c0_351, %c0_352] : memref<256x256xbf16, #tpu.memory_space<vmem>>, vector<256x256xbf16>
    %cst_353 = arith.constant dense<0.000000e+00> : vector<8x256xf32>
    %360 = tpu.matmul %358, %359, %cst_353 {dimension_numbers = #tpu.dot_dimension_numbers<[1], [0], [0], [1], [0, 0, 1, 1], [], []>} : vector<8x256xbf16>, vector<256x256xbf16>, vector<8x256xf32> -> vector<8x256xf32>
    %c56_354 = arith.constant 56 : index
    %c0_355 = arith.constant 0 : index
    %361 = vector.load %arg6[%c56_354, %c0_355] : memref<64x256xf32, #tpu.memory_space<vmem>>, vector<8x256xf32>
    %362 = arith.addf %361, %360 : vector<8x256xf32>
    %363 = math.tanh %362 : vector<8x256xf32>
    %364 = arith.truncf %363 : vector<8x256xf32> to vector<8x256xbf16>
    %c0_356 = arith.constant 0 : index
    %c0_357 = arith.constant 0 : index
    %365 = vector.load %arg3[%c0_356, %c0_357] : memref<256x256xbf16, #tpu.memory_space<vmem>>, vector<256x256xbf16>
    %cst_358 = arith.constant dense<0.000000e+00> : vector<8x256xf32>
    %366 = tpu.matmul %364, %365, %cst_358 {dimension_numbers = #tpu.dot_dimension_numbers<[1], [0], [0], [1], [0, 0, 1, 1], [], []>} : vector<8x256xbf16>, vector<256x256xbf16>, vector<8x256xf32> -> vector<8x256xf32>
    %c0_359 = arith.constant 0 : index
    %c0_360 = arith.constant 0 : index
    %367 = vector.load %arg4[%c0_359, %c0_360] : memref<1x256xf32, #tpu.memory_space<vmem>>, vector<1x256xf32>
    %368 = vector.broadcast %367 : vector<1x256xf32> to vector<8x256xf32>
    %369 = arith.addf %366, %368 : vector<8x256xf32>
    %c0_361 = arith.constant 0 : index
    %c0_362 = arith.constant 0 : index
    %370 = vector.load %arg5[%c0_361, %c0_362] : memref<8x256xf32, #tpu.memory_space<vmem>>, vector<8x256xf32>
    tpu.vector_store %arg5[%c0_361, %c0_362], %369 {strides = array<i32>} : memref<8x256xf32, #tpu.memory_space<vmem>>, vector<8x256xf32>,
    return
  }
}

</mosaic_0001>

<llo_original>
// kernel: tpu_custom_call.1
$region0: #{tpu_custom_call.1}
  #allocation0 [shape = 'u32[]', space=smem, size = 0x4, offset = 0x4, fixed_abs, tag = 'smem constant byte address 0x4 - core index']
  #allocation1 [shape = 'u32[144,128]{1,0:T(1,128)}', space=vmem, size = 0x12000, scoped, tag = 'internal scratch']
  #allocation2 [shape = 'f32[64,256]{1,0:T(8,128)}', space=vmem, size = 0x10000, scoped, tag = 'scratch operand']
  %s0 = inlined_call_operand.hbm [shape: s32[8,8], index: 0, kind: input, shape index: {}]
  %s1 = inlined_call_operand.hbm [shape: f32[23,1,256], index: 1, kind: input, shape index: {}]
  %s2 = inlined_call_operand.hbm [shape: bf16[256,256], index: 2, kind: input, shape index: {}]
  %s3 = inlined_call_operand.hbm [shape: bf16[256,256], index: 3, kind: input, shape index: {}]
  %s4 = inlined_call_operand.vmem [shape: f32[1,256], index: 4, kind: input, shape index: {}]
  %s5 = inlined_call_operand.hbm [shape: f32[8,256], index: 5, kind: output, shape index: {}]
  %s6 = sld [smem:[#allocation0]]
  $region46: #{tpu_custom_call.1} parent=0
    _
  %s8 = ssub.s32 1, %s6
  %s9 = scalar_select 0, %s8, %s6
  $region1: #{tpu_custom_call.1} parent=0
    #allocation3 [shape = 'u8[4096]{0}', space=smem, size = 0x1000, scoped, tag = 'input window, operand 0, single buffered']
    #allocation4 [shape = 's32[1]{0}', space=sflag, size = 0x4, scoped, tag = 'scoped memory for tpu_custom_call.1']
    #allocation5 [shape = 's32[1]{0}', space=sflag, size = 0x4, scoped, tag = 'scoped memory for tpu_custom_call.1']
    #allocation6 [shape = 's32[1]{0}', space=sflag, size = 0x4, scoped, tag = 'scoped memory for tpu_custom_call.1']
    #allocation7 [shape = 'u8[23552]{0}', space=vmem, size = 0x5c00, scoped, tag = 'input window, operand 1, single buffered']
    #allocation8 [shape = 'u8[131072]{0}', space=vmem, size = 0x20000, scoped, tag = 'input window, operand 2, single buffered']
    #allocation9 [shape = 's32[1]{0}', space=sflag, size = 0x4, scoped, tag = 'scoped memory for tpu_custom_call.1']
    #allocation10 [shape = 'u8[131072]{0}', space=vmem, size = 0x20000, scoped, tag = 'input window, operand 3, single buffered']
    #allocation11 [shape = 'u8[8192]{0}', space=vmem, size = 0x2000, scoped, tag = 'output window, operand 0, single buffered']
    %10 = vsyncpa [#allocation6], 0
    %11 = vsyncpa [#allocation4], 0
    %12 = vsyncpa [#allocation9], 0
    %13 = vsyncpa [#allocation5], 0
    // Predicated region
    $region2: #{tpu_custom_call.1} parent=1 // pred_check
      _
    $region3: #{tpu_custom_call.1} parent=1 // pred_check_branch
      %15 = sbr.rel (0) target = $region5
    $region4: #{tpu_custom_call.1} parent=1 // pred_region
      %s17 = ssub.s32 128, 128
      %18 = vsyncadd [#allocation6], %s17
      %21 = dma.hbm_to_smem %s0, 128, [#allocation3], [#allocation6]
    $region5: #{tpu_custom_call.1} parent=1 // pred_fallthru
      _
    // Predicated region
    $region6: #{tpu_custom_call.1} parent=1 // pred_check
      _
    $region7: #{tpu_custom_call.1} parent=1 // pred_check_branch
      %23 = sbr.rel (0) target = $region9
    $region8: #{tpu_custom_call.1} parent=1 // pred_region
      %s25 = ssub.s32 736, 736
      %26 = vsyncadd [#allocation4], %s25
      %s27 = sshll.u32 [#allocation7], 4
      %s28 = int_to_ptr.vmem [resolvable:$true] %s27
      %33 = dma.hbm_to_vmem [thread:$0]  %s1, 736, %s28, [#allocation4], 32, 32, 2
    $region9: #{tpu_custom_call.1} parent=1 // pred_fallthru
      _
    // Predicated region
    $region10: #{tpu_custom_call.1} parent=1 // pred_check
      _
    $region11: #{tpu_custom_call.1} parent=1 // pred_check_branch
      %35 = sbr.rel (0) target = $region13
    $region12: #{tpu_custom_call.1} parent=1 // pred_region
      %s37 = ssub.s32 4096, 4096
      %38 = vsyncadd [#allocation9], %s37
      %s39 = sshll.u32 [#allocation8], 4
      %s40 = int_to_ptr.vmem [resolvable:$true] %s39
      %45 = dma.hbm_to_vmem [thread:$0]  %s2, 4096, %s40, [#allocation9], 128, 128, 8
    $region13: #{tpu_custom_call.1} parent=1 // pred_fallthru
      _
    // Predicated region
    $region14: #{tpu_custom_call.1} parent=1 // pred_check
      _
    $region15: #{tpu_custom_call.1} parent=1 // pred_check_branch
      %47 = sbr.rel (0) target = $region17
    $region16: #{tpu_custom_call.1} parent=1 // pred_region
      %s49 = ssub.s32 4096, 4096
      %50 = vsyncadd [#allocation9], %s49
      %s51 = sshll.u32 [#allocation10], 4
      %s52 = int_to_ptr.vmem [resolvable:$true] %s51
      %57 = dma.hbm_to_vmem [thread:$0]  %s3, 4096, %s52, [#allocation9], 128, 128, 8
    $region17: #{tpu_custom_call.1} parent=1 // pred_fallthru
      _
    // Predicated region
    $region18: #{tpu_custom_call.1} parent=1 // pred_check
      _
    $region19: #{tpu_custom_call.1} parent=1 // pred_check_branch
      %59 = sbr.rel (0) target = $region21
    $region20: #{tpu_custom_call.1} parent=1 // pred_region
      _
    $region21: #{tpu_custom_call.1} parent=1 // pred_fallthru
      _
    // Predicated region
    $region22: #{tpu_custom_call.1} parent=1 // pred_check
      _
    $region23: #{tpu_custom_call.1} parent=1 // pred_check_branch
      %61 = sbr.rel (0) target = $region25
    $region24: #{tpu_custom_call.1} parent=1 // pred_region
      %62 = dma.done [#allocation6], 128
    $region25: #{tpu_custom_call.1} parent=1 // pred_fallthru
      _
    // Predicated region
    $region26: #{tpu_custom_call.1} parent=1 // pred_check
      _
    $region27: #{tpu_custom_call.1} parent=1 // pred_check_branch
      %64 = sbr.rel (0) target = $region29
    $region28: #{tpu_custom_call.1} parent=1 // pred_region
      %65 = dma.done [#allocation4], 736
    $region29: #{tpu_custom_call.1} parent=1 // pred_fallthru
      _
    // Predicated region
    $region30: #{tpu_custom_call.1} parent=1 // pred_check
      _
    $region31: #{tpu_custom_call.1} parent=1 // pred_check_branch
      %67 = sbr.rel (0) target = $region33
    $region32: #{tpu_custom_call.1} parent=1 // pred_region
      %68 = dma.done [#allocation9], 4096
    $region33: #{tpu_custom_call.1} parent=1 // pred_fallthru
      _
    // Predicated region
    $region34: #{tpu_custom_call.1} parent=1 // pred_check
      _
    $region35: #{tpu_custom_call.1} parent=1 // pred_check_branch
      %70 = sbr.rel (0) target = $region37
    $region36: #{tpu_custom_call.1} parent=1 // pred_region
      %71 = dma.done [#allocation9], 4096
    $region37: #{tpu_custom_call.1} parent=1 // pred_fallthru
      _
    %72 = sfence
    %s73 = sld [smem:[#allocation3]]
    %s74 = smul.u32 %s73, 2
    %s75 = scalar_lea.vmem [#allocation7], %s74
    %v76 = vld [vmem:[%s75] sm:$0x3]
    %v77 = vlaneseq
    %vm78 = vcmp.ge.s32.totalorder %v77, 0
    %vm79 = vcmp.lt.s32.totalorder %v77, 256
    %vm80 = vmand %vm78, %vm79
    %81 = vst.msk [vmem:[#allocation2] ss:$8 sm:$0x3] %vm80, %v76
    %82 = vst.msk [vmem:[#allocation2] ss:$8 sm:$0x0] %vm80, %v76
    %s83 = sld [smem:[#allocation3 + $0x1]]
    %s84 = smul.u32 %s83, 2
    %s85 = scalar_lea.vmem [#allocation7], %s84
    %v86 = vld [vmem:[%s85] sm:$0x3]
    %s87 = scalar_lea.vmem [#allocation2], 1
    %88 = vst.msk [vmem:[%s87] ss:$8 sm:$0x3] %vm80, %v86
    %89 = vst.msk [vmem:[%s87] ss:$8 sm:$0x0] %vm80, %v86
    %s90 = sld [smem:[#allocation3 + $0x2]]
    %s91 = smul.u32 %s90, 2
    %s92 = scalar_lea.vmem [#allocation7], %s91
    %v93 = vld [vmem:[%s92] sm:$0x3]
    %s94 = scalar_lea.vmem [#allocation2], 2
    %95 = vst.msk [vmem:[%s94] ss:$8 sm:$0x3] %vm80, %v93
    %96 = vst.msk [vmem:[%s94] ss:$8 sm:$0x0] %vm80, %v93
    %s97 = sld [smem:[#allocation3 + $0x3]]
    %s98 = smul.u32 %s97, 2
    %s99 = scalar_lea.vmem [#allocation7], %s98
    %v100 = vld [vmem:[%s99] sm:$0x3]
    %s101 = scalar_lea.vmem [#allocation2], 3
    %102 = vst.msk [vmem:[%s101] ss:$8 sm:$0x3] %vm80, %v100
    %103 = vst.msk [vmem:[%s101] ss:$8 sm:$0x0] %vm80, %v100
    %s104 = sld [smem:[#allocation3 + $0x4]]
    %s105 = smul.u32 %s104, 2
    %s106 = scalar_lea.vmem [#allocation7], %s105
    %v107 = vld [vmem:[%s106] sm:$0x3]
    %s108 = scalar_lea.vmem [#allocation2], 4
    %109 = vst.msk [vmem:[%s108] ss:$8 sm:$0x3] %vm80, %v107
    %110 = vst.msk [vmem:[%s108] ss:$8 sm:$0x0] %vm80, %v107
    %s111 = sld [smem:[#allocation3 + $0x5]]
    %s112 = smul.u32 %s111, 2
    %s113 = scalar_lea.vmem [#allocation7], %s112
    %v114 = vld [vmem:[%s113] sm:$0x3]
    %s115 = scalar_lea.vmem [#allocation2], 5
    %116 = vst.msk [vmem:[%s115] ss:$8 sm:$0x3] %vm80, %v114
    %117 = vst.msk [vmem:[%s115] ss:$8 sm:$0x0] %vm80, %v114
    %s118 = sld [smem:[#allocation3 + $0x6]]
    %s119 = smul.u32 %s118, 2
    %s120 = scalar_lea.vmem [#allocation7], %s119
    %v121 = vld [vmem:[%s120] sm:$0x3]
    %s122 = scalar_lea.vmem [#allocation2], 6
    %123 = vst.msk [vmem:[%s122] ss:$8 sm:$0x3] %vm80, %v121
    %124 = vst.msk [vmem:[%s122] ss:$8 sm:$0x0] %vm80, %v121
    %s125 = sld [smem:[#allocation3 + $0x7]]
    %s126 = smul.u32 %s125, 2
    %s127 = scalar_lea.vmem [#allocation7], %s126
    %v128 = vld [vmem:[%s127] sm:$0x3]
    %s129 = scalar_lea.vmem [#allocation2], 7
    %130 = vst.msk [vmem:[%s129] ss:$8 sm:$0x3] %vm80, %v128
    %131 = vst.msk [vmem:[%s129] ss:$8 sm:$0x0] %vm80, %v128
    %s132 = sld [smem:[#allocation3 + $0x80]]
    %s133 = smul.u32 %s132, 2
    %s134 = scalar_lea.vmem [#allocation7], %s133
    %v135 = vld [vmem:[%s134] sm:$0x3]
    %s136 = scalar_lea.vmem [#allocation2], 16
    %137 = vst.msk [vmem:[%s136] ss:$8 sm:$0x3] %vm80, %v135
    %138 = vst.msk [vmem:[%s136] ss:$8 sm:$0x0] %vm80, %v135
    %s139 = sld [smem:[#allocation3 + $0x81]]
    %s140 = smul.u32 %s139, 2
    %s141 = scalar_lea.vmem [#allocation7], %s140
    %v142 = vld [vmem:[%s141] sm:$0x3]
    %s143 = scalar_lea.vmem [#allocation2], 17
    %144 = vst.msk [vmem:[%s143] ss:$8 sm:$0x3] %vm80, %v142
    %145 = vst.msk [vmem:[%s143] ss:$8 sm:$0x0] %vm80, %v142
    %s146 = sld [smem:[#allocation3 + $0x82]]
    %s147 = smul.u32 %s146, 2
    %s148 = scalar_lea.vmem [#allocation7], %s147
    %v149 = vld [vmem:[%s148] sm:$0x3]
    %s150 = scalar_lea.vmem [#allocation2], 18
    %151 = vst.msk [vmem:[%s150] ss:$8 sm:$0x3] %vm80, %v149
    %152 = vst.msk [vmem:[%s150] ss:$8 sm:$0x0] %vm80, %v149
    %s153 = sld [smem:[#allocation3 + $0x83]]
    %s154 = smul.u32 %s153, 2
    %s155 = scalar_lea.vmem [#allocation7], %s154
    %v156 = vld [vmem:[%s155] sm:$0x3]
    %s157 = scalar_lea.vmem [#allocation2], 19
    %158 = vst.msk [vmem:[%s157] ss:$8 sm:$0x3] %vm80, %v156
    %159 = vst.msk [vmem:[%s157] ss:$8 sm:$0x0] %vm80, %v156
    %s160 = sld [smem:[#allocation3 + $0x84]]
    %s161 = smul.u32 %s160, 2
    %s162 = scalar_lea.vmem [#allocation7], %s161
    %v163 = vld [vmem:[%s162] sm:$0x3]
    %s164 = scalar_lea.vmem [#allocation2], 20
    %165 = vst.msk [vmem:[%s164] ss:$8 sm:$0x3] %vm80, %v163
    %166 = vst.msk [vmem:[%s164] ss:$8 sm:$0x0] %vm80, %v163
    %s167 = sld [smem:[#allocation3 + $0x85]]
    %s168 = smul.u32 %s167, 2
    %s169 = scalar_lea.vmem [#allocation7], %s168
    %v170 = vld [vmem:[%s169] sm:$0x3]
    %s171 = scalar_lea.vmem [#allocation2], 21
    %172 = vst.msk [vmem:[%s171] ss:$8 sm:$0x3] %vm80, %v170
    %173 = vst.msk [vmem:[%s171] ss:$8 sm:$0x0] %vm80, %v170
    %s174 = sld [smem:[#allocation3 + $0x86]]
    %s175 = smul.u32 %s174, 2
    %s176 = scalar_lea.vmem [#allocation7], %s175
    %v177 = vld [vmem:[%s176] sm:$0x3]
    %s178 = scalar_lea.vmem [#allocation2], 22
    %179 = vst.msk [vmem:[%s178] ss:$8 sm:$0x3] %vm80, %v177
    %180 = vst.msk [vmem:[%s178] ss:$8 sm:$0x0] %vm80, %v177
    %s181 = sld [smem:[#allocation3 + $0x87]]
    %s182 = smul.u32 %s181, 2
    %s183 = scalar_lea.vmem [#allocation7], %s182
    %v184 = vld [vmem:[%s183] sm:$0x3]
    %s185 = scalar_lea.vmem [#allocation2], 23
    %186 = vst.msk [vmem:[%s185] ss:$8 sm:$0x3] %vm80, %v184
    %187 = vst.msk [vmem:[%s185] ss:$8 sm:$0x0] %vm80, %v184
    %s188 = sld [smem:[#allocation3 + $0x100]]
    %s189 = smul.u32 %s188, 2
    %s190 = scalar_lea.vmem [#allocation7], %s189
    %v191 = vld [vmem:[%s190] sm:$0x3]
    %s192 = scalar_lea.vmem [#allocation2], 32
    %193 = vst.msk [vmem:[%s192] ss:$8 sm:$0x3] %vm80, %v191
    %194 = vst.msk [vmem:[%s192] ss:$8 sm:$0x0] %vm80, %v191
    %s195 = sld [smem:[#allocation3 + $0x101]]
    %s196 = smul.u32 %s195, 2
    %s197 = scalar_lea.vmem [#allocation7], %s196
    %v198 = vld [vmem:[%s197] sm:$0x3]
    %s199 = scalar_lea.vmem [#allocation2], 33
    %200 = vst.msk [vmem:[%s199] ss:$8 sm:$0x3] %vm80, %v198
    %201 = vst.msk [vmem:[%s199] ss:$8 sm:$0x0] %vm80, %v198
    %s202 = sld [smem:[#allocation3 + $0x102]]
    %s203 = smul.u32 %s202, 2
    %s204 = scalar_lea.vmem [#allocation7], %s203
    %v205 = vld [vmem:[%s204] sm:$0x3]
    %s206 = scalar_lea.vmem [#allocation2], 34
    %207 = vst.msk [vmem:[%s206] ss:$8 sm:$0x3] %vm80, %v205
    %208 = vst.msk [vmem:[%s206] ss:$8 sm:$0x0] %vm80, %v205
    %s209 = sld [smem:[#allocation3 + $0x103]]
    %s210 = smul.u32 %s209, 2
    %s211 = scalar_lea.vmem [#allocation7], %s210
    %v212 = vld [vmem:[%s211] sm:$0x3]
    %s213 = scalar_lea.vmem [#allocation2], 35
    %214 = vst.msk [vmem:[%s213] ss:$8 sm:$0x3] %vm80, %v212
    %215 = vst.msk [vmem:[%s213] ss:$8 sm:$0x0] %vm80, %v212
    %s216 = sld [smem:[#allocation3 + $0x104]]
    %s217 = smul.u32 %s216, 2
    %s218 = scalar_lea.vmem [#allocation7], %s217
    %v219 = vld [vmem:[%s218] sm:$0x3]
    %s220 = scalar_lea.vmem [#allocation2], 36
    %221 = vst.msk [vmem:[%s220] ss:$8 sm:$0x3] %vm80, %v219
    %222 = vst.msk [vmem:[%s220] ss:$8 sm:$0x0] %vm80, %v219
    %s223 = sld [smem:[#allocation3 + $0x105]]
    %s224 = smul.u32 %s223, 2
    %s225 = scalar_lea.vmem [#allocation7], %s224
    %v226 = vld [vmem:[%s225] sm:$0x3]
    %s227 = scalar_lea.vmem [#allocation2], 37
    %228 = vst.msk [vmem:[%s227] ss:$8 sm:$0x3] %vm80, %v226
    %229 = vst.msk [vmem:[%s227] ss:$8 sm:$0x0] %vm80, %v226
    %s230 = sld [smem:[#allocation3 + $0x106]]
    %s231 = smul.u32 %s230, 2
    %s232 = scalar_lea.vmem [#allocation7], %s231
    %v233 = vld [vmem:[%s232] sm:$0x3]
    %s234 = scalar_lea.vmem [#allocation2], 38
    %235 = vst.msk [vmem:[%s234] ss:$8 sm:$0x3] %vm80, %v233
    %236 = vst.msk [vmem:[%s234] ss:$8 sm:$0x0] %vm80, %v233
    %s237 = sld [smem:[#allocation3 + $0x107]]
    %s238 = smul.u32 %s237, 2
    %s239 = scalar_lea.vmem [#allocation7], %s238
    %v240 = vld [vmem:[%s239] sm:$0x3]
    %s241 = scalar_lea.vmem [#allocation2], 39
    %242 = vst.msk [vmem:[%s241] ss:$8 sm:$0x3] %vm80, %v240
    %243 = vst.msk [vmem:[%s241] ss:$8 sm:$0x0] %vm80, %v240
    %s244 = sld [smem:[#allocation3 + $0x180]]
    %s245 = smul.u32 %s244, 2
    %s246 = scalar_lea.vmem [#allocation7], %s245
    %v247 = vld [vmem:[%s246] sm:$0x3]
    %s248 = scalar_lea.vmem [#allocation2], 48
    %249 = vst.msk [vmem:[%s248] ss:$8 sm:$0x3] %vm80, %v247
    %250 = vst.msk [vmem:[%s248] ss:$8 sm:$0x0] %vm80, %v247
    %s251 = sld [smem:[#allocation3 + $0x181]]
    %s252 = smul.u32 %s251, 2
    %s253 = scalar_lea.vmem [#allocation7], %s252
    %v254 = vld [vmem:[%s253] sm:$0x3]
    %s255 = scalar_lea.vmem [#allocation2], 49
    %256 = vst.msk [vmem:[%s255] ss:$8 sm:$0x3] %vm80, %v254
    %257 = vst.msk [vmem:[%s255] ss:$8 sm:$0x0] %vm80, %v254
    %s258 = sld [smem:[#allocation3 + $0x182]]
    %s259 = smul.u32 %s258, 2
    %s260 = scalar_lea.vmem [#allocation7], %s259
    %v261 = vld [vmem:[%s260] sm:$0x3]
    %s262 = scalar_lea.vmem [#allocation2], 50
    %263 = vst.msk [vmem:[%s262] ss:$8 sm:$0x3] %vm80, %v261
    %264 = vst.msk [vmem:[%s262] ss:$8 sm:$0x0] %vm80, %v261
    %s265 = sld [smem:[#allocation3 + $0x183]]
    %s266 = smul.u32 %s265, 2
    %s267 = scalar_lea.vmem [#allocation7], %s266
    %v268 = vld [vmem:[%s267] sm:$0x3]
    %s269 = scalar_lea.vmem [#allocation2], 51
    %270 = vst.msk [vmem:[%s269] ss:$8 sm:$0x3] %vm80, %v268
    %271 = vst.msk [vmem:[%s269] ss:$8 sm:$0x0] %vm80, %v268
    %s272 = sld [smem:[#allocation3 + $0x184]]
    %s273 = smul.u32 %s272, 2
    %s274 = scalar_lea.vmem [#allocation7], %s273
    %v275 = vld [vmem:[%s274] sm:$0x3]
    %s276 = scalar_lea.vmem [#allocation2], 52
    %277 = vst.msk [vmem:[%s276] ss:$8 sm:$0x3] %vm80, %v275
    %278 = vst.msk [vmem:[%s276] ss:$8 sm:$0x0] %vm80, %v275
    %s279 = sld [smem:[#allocation3 + $0x185]]
    %s280 = smul.u32 %s279, 2
    %s281 = scalar_lea.vmem [#allocation7], %s280
    %v282 = vld [vmem:[%s281] sm:$0x3]
    %s283 = scalar_lea.vmem [#allocation2], 53
    %284 = vst.msk [vmem:[%s283] ss:$8 sm:$0x3] %vm80, %v282
    %285 = vst.msk [vmem:[%s283] ss:$8 sm:$0x0] %vm80, %v282
    %s286 = sld [smem:[#allocation3 + $0x186]]
    %s287 = smul.u32 %s286, 2
    %s288 = scalar_lea.vmem [#allocation7], %s287
    %v289 = vld [vmem:[%s288] sm:$0x3]
    %s290 = scalar_lea.vmem [#allocation2], 54
    %291 = vst.msk [vmem:[%s290] ss:$8 sm:$0x3] %vm80, %v289
    %292 = vst.msk [vmem:[%s290] ss:$8 sm:$0x0] %vm80, %v289
    %s293 = sld [smem:[#allocation3 + $0x187]]
    %s294 = smul.u32 %s293, 2
    %s295 = scalar_lea.vmem [#allocation7], %s294
    %v296 = vld [vmem:[%s295] sm:$0x3]
    %s297 = scalar_lea.vmem [#allocation2], 55
    %298 = vst.msk [vmem:[%s297] ss:$8 sm:$0x3] %vm80, %v296
    %299 = vst.msk [vmem:[%s297] ss:$8 sm:$0x0] %vm80, %v296
    %s300 = sld [smem:[#allocation3 + $0x200]]
    %s301 = smul.u32 %s300, 2
    %s302 = scalar_lea.vmem [#allocation7], %s301
    %v303 = vld [vmem:[%s302] sm:$0x3]
    %s304 = scalar_lea.vmem [#allocation2], 64
    %305 = vst.msk [vmem:[%s304] ss:$8 sm:$0x3] %vm80, %v303
    %306 = vst.msk [vmem:[%s304] ss:$8 sm:$0x0] %vm80, %v303
    %s307 = sld [smem:[#allocation3 + $0x201]]
    %s308 = smul.u32 %s307, 2
    %s309 = scalar_lea.vmem [#allocation7], %s308
    %v310 = vld [vmem:[%s309] sm:$0x3]
    %s311 = scalar_lea.vmem [#allocation2], 65
    %312 = vst.msk [vmem:[%s311] ss:$8 sm:$0x3] %vm80, %v310
    %313 = vst.msk [vmem:[%s311] ss:$8 sm:$0x0] %vm80, %v310
    %s314 = sld [smem:[#allocation3 + $0x202]]
    %s315 = smul.u32 %s314, 2
    %s316 = scalar_lea.vmem [#allocation7], %s315
    %v317 = vld [vmem:[%s316] sm:$0x3]
    %s318 = scalar_lea.vmem [#allocation2], 66
    %319 = vst.msk [vmem:[%s318] ss:$8 sm:$0x3] %vm80, %v317
    %320 = vst.msk [vmem:[%s318] ss:$8 sm:$0x0] %vm80, %v317
    %s321 = sld [smem:[#allocation3 + $0x203]]
    %s322 = smul.u32 %s321, 2
    %s323 = scalar_lea.vmem [#allocation7], %s322
    %v324 = vld [vmem:[%s323] sm:$0x3]
    %s325 = scalar_lea.vmem [#allocation2], 67
    %326 = vst.msk [vmem:[%s325] ss:$8 sm:$0x3] %vm80, %v324
    %327 = vst.msk [vmem:[%s325] ss:$8 sm:$0x0] %vm80, %v324
    %s328 = sld [smem:[#allocation3 + $0x204]]
    %s329 = smul.u32 %s328, 2
    %s330 = scalar_lea.vmem [#allocation7], %s329
    %v331 = vld [vmem:[%s330] sm:$0x3]
    %s332 = scalar_lea.vmem [#allocation2], 68
    %333 = vst.msk [vmem:[%s332] ss:$8 sm:$0x3] %vm80, %v331
    %334 = vst.msk [vmem:[%s332] ss:$8 sm:$0x0] %vm80, %v331
    %s335 = sld [smem:[#allocation3 + $0x205]]
    %s336 = smul.u32 %s335, 2
    %s337 = scalar_lea.vmem [#allocation7], %s336
    %v338 = vld [vmem:[%s337] sm:$0x3]
    %s339 = scalar_lea.vmem [#allocation2], 69
    %340 = vst.msk [vmem:[%s339] ss:$8 sm:$0x3] %vm80, %v338
    %341 = vst.msk [vmem:[%s339] ss:$8 sm:$0x0] %vm80, %v338
    %s342 = sld [smem:[#allocation3 + $0x206]]
    %s343 = smul.u32 %s342, 2
    %s344 = scalar_lea.vmem [#allocation7], %s343
    %v345 = vld [vmem:[%s344] sm:$0x3]
    %s346 = scalar_lea.vmem [#allocation2], 70
    %347 = vst.msk [vmem:[%s346] ss:$8 sm:$0x3] %vm80, %v345
    %348 = vst.msk [vmem:[%s346] ss:$8 sm:$0x0] %vm80, %v345
    %s349 = sld [smem:[#allocation3 + $0x207]]
    %s350 = smul.u32 %s349, 2
    %s351 = scalar_lea.vmem [#allocation7], %s350
    %v352 = vld [vmem:[%s351] sm:$0x3]
    %s353 = scalar_lea.vmem [#allocation2], 71
    %354 = vst.msk [vmem:[%s353] ss:$8 sm:$0x3] %vm80, %v352
    %355 = vst.msk [vmem:[%s353] ss:$8 sm:$0x0] %vm80, %v352
    %s356 = sld [smem:[#allocation3 + $0x280]]
    %s357 = smul.u32 %s356, 2
    %s358 = scalar_lea.vmem [#allocation7], %s357
    %v359 = vld [vmem:[%s358] sm:$0x3]
    %s360 = scalar_lea.vmem [#allocation2], 80
    %361 = vst.msk [vmem:[%s360] ss:$8 sm:$0x3] %vm80, %v359
    %362 = vst.msk [vmem:[%s360] ss:$8 sm:$0x0] %vm80, %v359
    %s363 = sld [smem:[#allocation3 + $0x281]]
    %s364 = smul.u32 %s363, 2
    %s365 = scalar_lea.vmem [#allocation7], %s364
    %v366 = vld [vmem:[%s365] sm:$0x3]
    %s367 = scalar_lea.vmem [#allocation2], 81
    %368 = vst.msk [vmem:[%s367] ss:$8 sm:$0x3] %vm80, %v366
    %369 = vst.msk [vmem:[%s367] ss:$8 sm:$0x0] %vm80, %v366
    %s370 = sld [smem:[#allocation3 + $0x282]]
    %s371 = smul.u32 %s370, 2
    %s372 = scalar_lea.vmem [#allocation7], %s371
    %v373 = vld [vmem:[%s372] sm:$0x3]
    %s374 = scalar_lea.vmem [#allocation2], 82
    %375 = vst.msk [vmem:[%s374] ss:$8 sm:$0x3] %vm80, %v373
    %376 = vst.msk [vmem:[%s374] ss:$8 sm:$0x0] %vm80, %v373
    %s377 = sld [smem:[#allocation3 + $0x283]]
    %s378 = smul.u32 %s377, 2
    %s379 = scalar_lea.vmem [#allocation7], %s378
    %v380 = vld [vmem:[%s379] sm:$0x3]
    %s381 = scalar_lea.vmem [#allocation2], 83
    %382 = vst.msk [vmem:[%s381] ss:$8 sm:$0x3] %vm80, %v380
    %383 = vst.msk [vmem:[%s381] ss:$8 sm:$0x0] %vm80, %v380
    %s384 = sld [smem:[#allocation3 + $0x284]]
    %s385 = smul.u32 %s384, 2
    %s386 = scalar_lea.vmem [#allocation7], %s385
    %v387 = vld [vmem:[%s386] sm:$0x3]
    %s388 = scalar_lea.vmem [#allocation2], 84
    %389 = vst.msk [vmem:[%s388] ss:$8 sm:$0x3] %vm80, %v387
    %390 = vst.msk [vmem:[%s388] ss:$8 sm:$0x0] %vm80, %v387
    %s391 = sld [smem:[#allocation3 + $0x285]]
    %s392 = smul.u32 %s391, 2
    %s393 = scalar_lea.vmem [#allocation7], %s392
    %v394 = vld [vmem:[%s393] sm:$0x3]
    %s395 = scalar_lea.vmem [#allocation2], 85
    %396 = vst.msk [vmem:[%s395] ss:$8 sm:$0x3] %vm80, %v394
    %397 = vst.msk [vmem:[%s395] ss:$8 sm:$0x0] %vm80, %v394
    %s398 = sld [smem:[#allocation3 + $0x286]]
    %s399 = smul.u32 %s398, 2
    %s400 = scalar_lea.vmem [#allocation7], %s399
    %v401 = vld [vmem:[%s400] sm:$0x3]
    %s402 = scalar_lea.vmem [#allocation2], 86
    %403 = vst.msk [vmem:[%s402] ss:$8 sm:$0x3] %vm80, %v401
    %404 = vst.msk [vmem:[%s402] ss:$8 sm:$0x0] %vm80, %v401
    %s405 = sld [smem:[#allocation3 + $0x287]]
    %s406 = smul.u32 %s405, 2
    %s407 = scalar_lea.vmem [#allocation7], %s406
    %v408 = vld [vmem:[%s407] sm:$0x3]
    %s409 = scalar_lea.vmem [#allocation2], 87
    %410 = vst.msk [vmem:[%s409] ss:$8 sm:$0x3] %vm80, %v408
    %411 = vst.msk [vmem:[%s409] ss:$8 sm:$0x0] %vm80, %v408
    %s412 = sld [smem:[#allocation3 + $0x300]]
    %s413 = smul.u32 %s412, 2
    %s414 = scalar_lea.vmem [#allocation7], %s413
    %v415 = vld [vmem:[%s414] sm:$0x3]
    %s416 = scalar_lea.vmem [#allocation2], 96
    %417 = vst.msk [vmem:[%s416] ss:$8 sm:$0x3] %vm80, %v415
    %418 = vst.msk [vmem:[%s416] ss:$8 sm:$0x0] %vm80, %v415
    %s419 = sld [smem:[#allocation3 + $0x301]]
    %s420 = smul.u32 %s419, 2
    %s421 = scalar_lea.vmem [#allocation7], %s420
    %v422 = vld [vmem:[%s421] sm:$0x3]
    %s423 = scalar_lea.vmem [#allocation2], 97
    %424 = vst.msk [vmem:[%s423] ss:$8 sm:$0x3] %vm80, %v422
    %425 = vst.msk [vmem:[%s423] ss:$8 sm:$0x0] %vm80, %v422
    %s426 = sld [smem:[#allocation3 + $0x302]]
    %s427 = smul.u32 %s426, 2
    %s428 = scalar_lea.vmem [#allocation7], %s427
    %v429 = vld [vmem:[%s428] sm:$0x3]
    %s430 = scalar_lea.vmem [#allocation2], 98
    %431 = vst.msk [vmem:[%s430] ss:$8 sm:$0x3] %vm80, %v429
    %432 = vst.msk [vmem:[%s430] ss:$8 sm:$0x0] %vm80, %v429
    %s433 = sld [smem:[#allocation3 + $0x303]]
    %s434 = smul.u32 %s433, 2
    %s435 = scalar_lea.vmem [#allocation7], %s434
    %v436 = vld [vmem:[%s435] sm:$0x3]
    %s437 = scalar_lea.vmem [#allocation2], 99
    %438 = vst.msk [vmem:[%s437] ss:$8 sm:$0x3] %vm80, %v436
    %439 = vst.msk [vmem:[%s437] ss:$8 sm:$0x0] %vm80, %v436
    %s440 = sld [smem:[#allocation3 + $0x304]]
    %s441 = smul.u32 %s440, 2
    %s442 = scalar_lea.vmem [#allocation7], %s441
    %v443 = vld [vmem:[%s442] sm:$0x3]
    %s444 = scalar_lea.vmem [#allocation2], 100
    %445 = vst.msk [vmem:[%s444] ss:$8 sm:$0x3] %vm80, %v443
    %446 = vst.msk [vmem:[%s444] ss:$8 sm:$0x0] %vm80, %v443
    %s447 = sld [smem:[#allocation3 + $0x305]]
    %s448 = smul.u32 %s447, 2
    %s449 = scalar_lea.vmem [#allocation7], %s448
    %v450 = vld [vmem:[%s449] sm:$0x3]
    %s451 = scalar_lea.vmem [#allocation2], 101
    %452 = vst.msk [vmem:[%s451] ss:$8 sm:$0x3] %vm80, %v450
    %453 = vst.msk [vmem:[%s451] ss:$8 sm:$0x0] %vm80, %v450
    %s454 = sld [smem:[#allocation3 + $0x306]]
    %s455 = smul.u32 %s454, 2
    %s456 = scalar_lea.vmem [#allocation7], %s455
    %v457 = vld [vmem:[%s456] sm:$0x3]
    %s458 = scalar_lea.vmem [#allocation2], 102
    %459 = vst.msk [vmem:[%s458] ss:$8 sm:$0x3] %vm80, %v457
    %460 = vst.msk [vmem:[%s458] ss:$8 sm:$0x0] %vm80, %v457
    %s461 = sld [smem:[#allocation3 + $0x307]]
    %s462 = smul.u32 %s461, 2
    %s463 = scalar_lea.vmem [#allocation7], %s462
    %v464 = vld [vmem:[%s463] sm:$0x3]
    %s465 = scalar_lea.vmem [#allocation2], 103
    %466 = vst.msk [vmem:[%s465] ss:$8 sm:$0x3] %vm80, %v464
    %467 = vst.msk [vmem:[%s465] ss:$8 sm:$0x0] %vm80, %v464
    %s468 = sld [smem:[#allocation3 + $0x380]]
    %s469 = smul.u32 %s468, 2
    %s470 = scalar_lea.vmem [#allocation7], %s469
    %v471 = vld [vmem:[%s470] sm:$0x3]
    %s472 = scalar_lea.vmem [#allocation2], 112
    %473 = vst.msk [vmem:[%s472] ss:$8 sm:$0x3] %vm80, %v471
    %474 = vst.msk [vmem:[%s472] ss:$8 sm:$0x0] %vm80, %v471
    %s475 = sld [smem:[#allocation3 + $0x381]]
    %s476 = smul.u32 %s475, 2
    %s477 = scalar_lea.vmem [#allocation7], %s476
    %v478 = vld [vmem:[%s477] sm:$0x3]
    %s479 = scalar_lea.vmem [#allocation2], 113
    %480 = vst.msk [vmem:[%s479] ss:$8 sm:$0x3] %vm80, %v478
    %481 = vst.msk [vmem:[%s479] ss:$8 sm:$0x0] %vm80, %v478
    %s482 = sld [smem:[#allocation3 + $0x382]]
    %s483 = smul.u32 %s482, 2
    %s484 = scalar_lea.vmem [#allocation7], %s483
    %v485 = vld [vmem:[%s484] sm:$0x3]
    %s486 = scalar_lea.vmem [#allocation2], 114
    %487 = vst.msk [vmem:[%s486] ss:$8 sm:$0x3] %vm80, %v485
    %488 = vst.msk [vmem:[%s486] ss:$8 sm:$0x0] %vm80, %v485
    %s489 = sld [smem:[#allocation3 + $0x383]]
    %s490 = smul.u32 %s489, 2
    %s491 = scalar_lea.vmem [#allocation7], %s490
    %v492 = vld [vmem:[%s491] sm:$0x3]
    %s493 = scalar_lea.vmem [#allocation2], 115
    %494 = vst.msk [vmem:[%s493] ss:$8 sm:$0x3] %vm80, %v492
    %495 = vst.msk [vmem:[%s493] ss:$8 sm:$0x0] %vm80, %v492
    %s496 = sld [smem:[#allocation3 + $0x384]]
    %s497 = smul.u32 %s496, 2
    %s498 = scalar_lea.vmem [#allocation7], %s497
    %v499 = vld [vmem:[%s498] sm:$0x3]
    %s500 = scalar_lea.vmem [#allocation2], 116
    %501 = vst.msk [vmem:[%s500] ss:$8 sm:$0x3] %vm80, %v499
    %502 = vst.msk [vmem:[%s500] ss:$8 sm:$0x0] %vm80, %v499
    %s503 = sld [smem:[#allocation3 + $0x385]]
    %s504 = smul.u32 %s503, 2
    %s505 = scalar_lea.vmem [#allocation7], %s504
    %v506 = vld [vmem:[%s505] sm:$0x3]
    %s507 = scalar_lea.vmem [#allocation2], 117
    %508 = vst.msk [vmem:[%s507] ss:$8 sm:$0x3] %vm80, %v506
    %509 = vst.msk [vmem:[%s507] ss:$8 sm:$0x0] %vm80, %v506
    %s510 = sld [smem:[#allocation3 + $0x386]]
    %s511 = smul.u32 %s510, 2
    %s512 = scalar_lea.vmem [#allocation7], %s511
    %v513 = vld [vmem:[%s512] sm:$0x3]
    %s514 = scalar_lea.vmem [#allocation2], 118
    %515 = vst.msk [vmem:[%s514] ss:$8 sm:$0x3] %vm80, %v513
    %516 = vst.msk [vmem:[%s514] ss:$8 sm:$0x0] %vm80, %v513
    %s517 = sld [smem:[#allocation3 + $0x387]]
    %s518 = smul.u32 %s517, 2
    %s519 = scalar_lea.vmem [#allocation7], %s518
    %v520 = vld [vmem:[%s519] sm:$0x3]
    %s521 = scalar_lea.vmem [#allocation2], 119
    %522 = vst.msk [vmem:[%s521] ss:$8 sm:$0x3] %vm80, %v520
    %523 = vst.msk [vmem:[%s521] ss:$8 sm:$0x0] %vm80, %v520
    %v524 = vld [vmem:[#allocation2] sm:$0xff]
    %v525 = vld [vmem:[#allocation2 + $0x8] sm:$0xff]
    %v526 = vtanh.pop %v524
    %v527 = vtanh.pop %v525
    %v528 = vpack.c.bf16 %v526, %v526
    %v529 = vpack.c.bf16 %v527, %v527
    %v530 = vld [vmem:[#allocation8] sm:$0xff]
    %v531 = vld [vmem:[#allocation8 + $0x8] sm:$0xff]
    %v532 = vld [vmem:[#allocation8 + $0x10] sm:$0xff]
    %v533 = vld [vmem:[#allocation8 + $0x18] sm:$0xff]
    %v534 = vld [vmem:[#allocation8 + $0x20] sm:$0xff]
    %v535 = vld [vmem:[#allocation8 + $0x28] sm:$0xff]
    %v536 = vld [vmem:[#allocation8 + $0x30] sm:$0xff]
    %v537 = vld [vmem:[#allocation8 + $0x38] sm:$0xff]
    %v538 = vld [vmem:[#allocation8 + $0x40] sm:$0xff]
    %v539 = vld [vmem:[#allocation8 + $0x48] sm:$0xff]
    %v540 = vld [vmem:[#allocation8 + $0x50] sm:$0xff]
    %v541 = vld [vmem:[#allocation8 + $0x58] sm:$0xff]
    %v542 = vld [vmem:[#allocation8 + $0x60] sm:$0xff]
    %v543 = vld [vmem:[#allocation8 + $0x68] sm:$0xff]
    %v544 = vld [vmem:[#allocation8 + $0x70] sm:$0xff]
    %v545 = vld [vmem:[#allocation8 + $0x78] sm:$0xff]
    %v546 = vld [vmem:[#allocation8 + $0x80] sm:$0xff]
    %v547 = vld [vmem:[#allocation8 + $0x88] sm:$0xff]
    %v548 = vld [vmem:[#allocation8 + $0x90] sm:$0xff]
    %v549 = vld [vmem:[#allocation8 + $0x98] sm:$0xff]
    %v550 = vld [vmem:[#allocation8 + $0xa0] sm:$0xff]
    %v551 = vld [vmem:[#allocation8 + $0xa8] sm:$0xff]
    %v552 = vld [vmem:[#allocation8 + $0xb0] sm:$0xff]
    %v553 = vld [vmem:[#allocation8 + $0xb8] sm:$0xff]
    %v554 = vld [vmem:[#allocation8 + $0xc0] sm:$0xff]
    %v555 = vld [vmem:[#allocation8 + $0xc8] sm:$0xff]
    %v556 = vld [vmem:[#allocation8 + $0xd0] sm:$0xff]
    %v557 = vld [vmem:[#allocation8 + $0xd8] sm:$0xff]
    %v558 = vld [vmem:[#allocation8 + $0xe0] sm:$0xff]
    %v559 = vld [vmem:[#allocation8 + $0xe8] sm:$0xff]
    %v560 = vld [vmem:[#allocation8 + $0xf0] sm:$0xff]
    %v561 = vld [vmem:[#allocation8 + $0xf8] sm:$0xff]
    %v594 = vunpack.c.l.b16 %v530
    %v595 = vunpack.c.h.b16 %v530
    %v596 = vunpack.c.l.b16 %v531
    %v597 = vunpack.c.h.b16 %v531
    %v598 = vunpack.c.l.b16 %v532
    %v599 = vunpack.c.h.b16 %v532
    %v600 = vunpack.c.l.b16 %v533
    %v601 = vunpack.c.h.b16 %v533
    %v602 = vunpack.c.l.b16 %v534
    %v603 = vunpack.c.h.b16 %v534
    %v604 = vunpack.c.l.b16 %v535
    %v605 = vunpack.c.h.b16 %v535
    %v606 = vunpack.c.l.b16 %v536
    %v607 = vunpack.c.h.b16 %v536
    %v608 = vunpack.c.l.b16 %v537
    %v609 = vunpack.c.h.b16 %v537
    %v610 = vunpack.c.l.b16 %v538
    %v611 = vunpack.c.h.b16 %v538
    %v612 = vunpack.c.l.b16 %v539
    %v613 = vunpack.c.h.b16 %v539
    %v614 = vunpack.c.l.b16 %v540
    %v615 = vunpack.c.h.b16 %v540
    %v616 = vunpack.c.l.b16 %v541
    %v617 = vunpack.c.h.b16 %v541
    %v618 = vunpack.c.l.b16 %v542
    %v619 = vunpack.c.h.b16 %v542
    %v620 = vunpack.c.l.b16 %v543
    %v621 = vunpack.c.h.b16 %v543
    %v622 = vunpack.c.l.b16 %v544
    %v623 = vunpack.c.h.b16 %v544
    %v624 = vunpack.c.l.b16 %v545
    %v625 = vunpack.c.h.b16 %v545
    %v626 = vunpack.c.l.b16 %v546
    %v627 = vunpack.c.h.b16 %v546
    %v628 = vunpack.c.l.b16 %v547
    %v629 = vunpack.c.h.b16 %v547
    %v630 = vunpack.c.l.b16 %v548
    %v631 = vunpack.c.h.b16 %v548
    %v632 = vunpack.c.l.b16 %v549
    %v633 = vunpack.c.h.b16 %v549
    %v634 = vunpack.c.l.b16 %v550
    %v635 = vunpack.c.h.b16 %v550
    %v636 = vunpack.c.l.b16 %v551
    %v637 = vunpack.c.h.b16 %v551
    %v638 = vunpack.c.l.b16 %v552
    %v639 = vunpack.c.h.b16 %v552
    %v640 = vunpack.c.l.b16 %v553
    %v641 = vunpack.c.h.b16 %v553
    %v642 = vunpack.c.l.b16 %v554
    %v643 = vunpack.c.h.b16 %v554
    %v644 = vunpack.c.l.b16 %v555
    %v645 = vunpack.c.h.b16 %v555
    %v646 = vunpack.c.l.b16 %v556
    %v647 = vunpack.c.h.b16 %v556
    %v648 = vunpack.c.l.b16 %v557
    %v649 = vunpack.c.h.b16 %v557
    %v650 = vunpack.c.l.b16 %v558
    %v651 = vunpack.c.h.b16 %v558
    %v652 = vunpack.c.l.b16 %v559
    %v653 = vunpack.c.h.b16 %v559
    %v654 = vunpack.c.l.b16 %v560
    %v655 = vunpack.c.h.b16 %v560
    %v656 = vunpack.c.l.b16 %v561
    %v657 = vunpack.c.h.b16 %v561
    %v658 = vpack.c.b16 %v596, %v594
    %v659 = vpack.c.b16 %v597, %v595
    %v660 = vpack.c.b16 %v600, %v598
    %v661 = vpack.c.b16 %v601, %v599
    %v662 = vpack.c.b16 %v604, %v602
    %v663 = vpack.c.b16 %v605, %v603
    %v664 = vpack.c.b16 %v608, %v606
    %v665 = vpack.c.b16 %v609, %v607
    %v666 = vpack.c.b16 %v612, %v610
    %v667 = vpack.c.b16 %v613, %v611
    %v668 = vpack.c.b16 %v616, %v614
    %v669 = vpack.c.b16 %v617, %v615
    %v670 = vpack.c.b16 %v620, %v618
    %v671 = vpack.c.b16 %v621, %v619
    %v672 = vpack.c.b16 %v624, %v622
    %v673 = vpack.c.b16 %v625, %v623
    %v674 = vpack.c.b16 %v628, %v626
    %v675 = vpack.c.b16 %v629, %v627
    %v676 = vpack.c.b16 %v632, %v630
    %v677 = vpack.c.b16 %v633, %v631
    %v678 = vpack.c.b16 %v636, %v634
    %v679 = vpack.c.b16 %v637, %v635
    %v680 = vpack.c.b16 %v640, %v638
    %v681 = vpack.c.b16 %v641, %v639
    %v682 = vpack.c.b16 %v644, %v642
    %v683 = vpack.c.b16 %v645, %v643
    %v684 = vpack.c.b16 %v648, %v646
    %v685 = vpack.c.b16 %v649, %v647
    %v686 = vpack.c.b16 %v652, %v650
    %v687 = vpack.c.b16 %v653, %v651
    %v688 = vpack.c.b16 %v656, %v654
    %v689 = vpack.c.b16 %v657, %v655
    %722 = vmatprep.subr.bf16.mxu0 %v659
    %723 = vmatpush1.bf16.msra.mxu0 %v658
    %724 = vmatprep.subr.bf16.mxu0 %v661
    %725 = vmatpush1.bf16.msra.mxu0 %v660
    %726 = vmatprep.subr.bf16.mxu0 %v663
    %727 = vmatpush1.bf16.msra.mxu0 %v662
    %728 = vmatprep.subr.bf16.mxu0 %v665
    %729 = vmatpush1.bf16.msra.mxu0 %v664
    %730 = vmatprep.subr.bf16.mxu0 %v667
    %731 = vmatpush1.bf16.msra.mxu0 %v666
    %732 = vmatprep.subr.bf16.mxu0 %v669
    %733 = vmatpush1.bf16.msra.mxu0 %v668
    %734 = vmatprep.subr.bf16.mxu0 %v671
    %735 = vmatpush1.bf16.msra.mxu0 %v670
    %736 = vmatprep.subr.bf16.mxu0 %v673
    %737 = vmatpush1.bf16.msra.mxu0 %v672
    %738 = vmatprep.subr.bf16.mxu0 %v675
    %739 = vmatpush1.bf16.msra.mxu0 %v674
    %740 = vmatprep.subr.bf16.mxu0 %v677
    %741 = vmatpush1.bf16.msra.mxu0 %v676
    %742 = vmatprep.subr.bf16.mxu0 %v679
    %743 = vmatpush1.bf16.msra.mxu0 %v678
    %744 = vmatprep.subr.bf16.mxu0 %v681
    %745 = vmatpush1.bf16.msra.mxu0 %v680
    %746 = vmatprep.subr.bf16.mxu0 %v683
    %747 = vmatpush1.bf16.msra.mxu0 %v682
    %748 = vmatprep.subr.bf16.mxu0 %v685
    %749 = vmatpush1.bf16.msra.mxu0 %v684
    %750 = vmatprep.subr.bf16.mxu0 %v687
    %751 = vmatpush1.bf16.msra.mxu0 %v686
    %752 = vmatprep.subr.bf16.mxu0 %v689
    %753 = vmatpush1.bf16.msra.mxu0 %v688
    %754 = vmatprep.mubr.bf16.mxu0 %v529
    %755 = vmatmul.mubr.bf16.gmra.mrb[0].mxu0 %v528
    %v756 = vpop.f32.mrb[0].mxu0
    %v757 = vadd.f32 0.0, %v756
    %v758 = vpop.f32.mrb[0].mxu0
    %v759 = vadd.f32 0.0, %v758
    %v760 = vpop.f32.mrb[0].mxu0
    %v761 = vpop.f32.mrb[0].mxu0
    %762 = vdwg.mxu0
    %v763 = vld [vmem:[#allocation2 + $0x10] sm:$0xff]
    %v764 = vld [vmem:[#allocation2 + $0x18] sm:$0xff]
    %v765 = vadd.f32 %v763, %v757
    %v766 = vadd.f32 %v764, %v759
    %v767 = vtanh.pop %v765
    %v768 = vtanh.pop %v766
    %v769 = vpack.c.bf16 %v767, %v767
    %v770 = vpack.c.bf16 %v768, %v768
    %771 = vmatprep.subr.bf16.mxu0 %v659
    %772 = vmatpush1.bf16.msra.mxu0 %v658
    %773 = vmatprep.subr.bf16.mxu0 %v661
    %774 = vmatpush1.bf16.msra.mxu0 %v660
    %775 = vmatprep.subr.bf16.mxu0 %v663
    %776 = vmatpush1.bf16.msra.mxu0 %v662
    %777 = vmatprep.subr.bf16.mxu0 %v665
    %778 = vmatpush1.bf16.msra.mxu0 %v664
    %779 = vmatprep.subr.bf16.mxu0 %v667
    %780 = vmatpush1.bf16.msra.mxu0 %v666
    %781 = vmatprep.subr.bf16.mxu0 %v669
    %782 = vmatpush1.bf16.msra.mxu0 %v668
    %783 = vmatprep.subr.bf16.mxu0 %v671
    %784 = vmatpush1.bf16.msra.mxu0 %v670
    %785 = vmatprep.subr.bf16.mxu0 %v673
    %786 = vmatpush1.bf16.msra.mxu0 %v672
    %787 = vmatprep.subr.bf16.mxu0 %v675
    %788 = vmatpush1.bf16.msra.mxu0 %v674
    %789 = vmatprep.subr.bf16.mxu0 %v677
    %790 = vmatpush1.bf16.msra.mxu0 %v676
    %791 = vmatprep.subr.bf16.mxu0 %v679
    %792 = vmatpush1.bf16.msra.mxu0 %v678
    %793 = vmatprep.subr.bf16.mxu0 %v681
    %794 = vmatpush1.bf16.msra.mxu0 %v680
    %795 = vmatprep.subr.bf16.mxu0 %v683
    %796 = vmatpush1.bf16.msra.mxu0 %v682
    %797 = vmatprep.subr.bf16.mxu0 %v685
    %798 = vmatpush1.bf16.msra.mxu0 %v684
    %799 = vmatprep.subr.bf16.mxu0 %v687
    %800 = vmatpush1.bf16.msra.mxu0 %v686
    %801 = vmatprep.subr.bf16.mxu0 %v689
    %802 = vmatpush1.bf16.msra.mxu0 %v688
    %803 = vmatprep.mubr.bf16.mxu0 %v770
    %804 = vmatmul.mubr.bf16.gmra.mrb[0].mxu0 %v769
    %v805 = vpop.f32.mrb[0].mxu0
    %v806 = vadd.f32 0.0, %v805
    %v807 = vpop.f32.mrb[0].mxu0
    %v808 = vadd.f32 0.0, %v807
    %v809 = vpop.f32.mrb[0].mxu0
    %v810 = vpop.f32.mrb[0].mxu0
    %811 = vdwg.mxu0
    %v812 = vld [vmem:[#allocation2 + $0x20] sm:$0xff]
    %v813 = vld [vmem:[#allocation2 + $0x28] sm:$0xff]
    %v814 = vadd.f32 %v812, %v806
    %v815 = vadd.f32 %v813, %v808
    %v816 = vtanh.pop %v814
    %v817 = vtanh.pop %v815
    %v818 = vpack.c.bf16 %v816, %v816
    %v819 = vpack.c.bf16 %v817, %v817
    %820 = vmatprep.subr.bf16.mxu0 %v659
    %821 = vmatpush1.bf16.msra.mxu0 %v658
    %822 = vmatprep.subr.bf16.mxu0 %v661
    %823 = vmatpush1.bf16.msra.mxu0 %v660
    %824 = vmatprep.subr.bf16.mxu0 %v663
    %825 = vmatpush1.bf16.msra.mxu0 %v662
    %826 = vmatprep.subr.bf16.mxu0 %v665
    %827 = vmatpush1.bf16.msra.mxu0 %v664
    %828 = vmatprep.subr.bf16.mxu0 %v667
    %829 = vmatpush1.bf16.msra.mxu0 %v666
    %830 = vmatprep.subr.bf16.mxu0 %v669
    %831 = vmatpush1.bf16.msra.mxu0 %v668
    %832 = vmatprep.subr.bf16.mxu0 %v671
    %833 = vmatpush1.bf16.msra.mxu0 %v670
    %834 = vmatprep.subr.bf16.mxu0 %v673
    %835 = vmatpush1.bf16.msra.mxu0 %v672
    %836 = vmatprep.subr.bf16.mxu0 %v675
    %837 = vmatpush1.bf16.msra.mxu0 %v674
    %838 = vmatprep.subr.bf16.mxu0 %v677
    %839 = vmatpush1.bf16.msra.mxu0 %v676
    %840 = vmatprep.subr.bf16.mxu0 %v679
    %841 = vmatpush1.bf16.msra.mxu0 %v678
    %842 = vmatprep.subr.bf16.mxu0 %v681
    %843 = vmatpush1.bf16.msra.mxu0 %v680
    %844 = vmatprep.subr.bf16.mxu0 %v683
    %845 = vmatpush1.bf16.msra.mxu0 %v682
    %846 = vmatprep.subr.bf16.mxu0 %v685
    %847 = vmatpush1.bf16.msra.mxu0 %v684
    %848 = vmatprep.subr.bf16.mxu0 %v687
    %849 = vmatpush1.bf16.msra.mxu0 %v686
    %850 = vmatprep.subr.bf16.mxu0 %v689
    %851 = vmatpush1.bf16.msra.mxu0 %v688
    %852 = vmatprep.mubr.bf16.mxu0 %v819
    %853 = vmatmul.mubr.bf16.gmra.mrb[0].mxu0 %v818
    %v854 = vpop.f32.mrb[0].mxu0
    %v855 = vadd.f32 0.0, %v854
    %v856 = vpop.f32.mrb[0].mxu0
    %v857 = vadd.f32 0.0, %v856
    %v858 = vpop.f32.mrb[0].mxu0
    %v859 = vpop.f32.mrb[0].mxu0
    %860 = vdwg.mxu0
    %v861 = vld [vmem:[#allocation2 + $0x30] sm:$0xff]
    %v862 = vld [vmem:[#allocation2 + $0x38] sm:$0xff]
    %v863 = vadd.f32 %v861, %v855
    %v864 = vadd.f32 %v862, %v857
    %v865 = vtanh.pop %v863
    %v866 = vtanh.pop %v864
    %v867 = vpack.c.bf16 %v865, %v865
    %v868 = vpack.c.bf16 %v866, %v866
    %869 = vmatprep.subr.bf16.mxu0 %v659
    %870 = vmatpush1.bf16.msra.mxu0 %v658
    %871 = vmatprep.subr.bf16.mxu0 %v661
    %872 = vmatpush1.bf16.msra.mxu0 %v660
    %873 = vmatprep.subr.bf16.mxu0 %v663
    %874 = vmatpush1.bf16.msra.mxu0 %v662
    %875 = vmatprep.subr.bf16.mxu0 %v665
    %876 = vmatpush1.bf16.msra.mxu0 %v664
    %877 = vmatprep.subr.bf16.mxu0 %v667
    %878 = vmatpush1.bf16.msra.mxu0 %v666
    %879 = vmatprep.subr.bf16.mxu0 %v669
    %880 = vmatpush1.bf16.msra.mxu0 %v668
    %881 = vmatprep.subr.bf16.mxu0 %v671
    %882 = vmatpush1.bf16.msra.mxu0 %v670
    %883 = vmatprep.subr.bf16.mxu0 %v673
    %884 = vmatpush1.bf16.msra.mxu0 %v672
    %885 = vmatprep.subr.bf16.mxu0 %v675
    %886 = vmatpush1.bf16.msra.mxu0 %v674
    %887 = vmatprep.subr.bf16.mxu0 %v677
    %888 = vmatpush1.bf16.msra.mxu0 %v676
    %889 = vmatprep.subr.bf16.mxu0 %v679
    %890 = vmatpush1.bf16.msra.mxu0 %v678
    %891 = vmatprep.subr.bf16.mxu0 %v681
    %892 = vmatpush1.bf16.msra.mxu0 %v680
    %893 = vmatprep.subr.bf16.mxu0 %v683
    %894 = vmatpush1.bf16.msra.mxu0 %v682
    %895 = vmatprep.subr.bf16.mxu0 %v685
    %896 = vmatpush1.bf16.msra.mxu0 %v684
    %897 = vmatprep.subr.bf16.mxu0 %v687
    %898 = vmatpush1.bf16.msra.mxu0 %v686
    %899 = vmatprep.subr.bf16.mxu0 %v689
    %900 = vmatpush1.bf16.msra.mxu0 %v688
    %901 = vmatprep.mubr.bf16.mxu0 %v868
    %902 = vmatmul.mubr.bf16.gmra.mrb[0].mxu0 %v867
    %v903 = vpop.f32.mrb[0].mxu0
    %v904 = vadd.f32 0.0, %v903
    %v905 = vpop.f32.mrb[0].mxu0
    %v906 = vadd.f32 0.0, %v905
    %v907 = vpop.f32.mrb[0].mxu0
    %v908 = vpop.f32.mrb[0].mxu0
    %909 = vdwg.mxu0
    %v910 = vld [vmem:[#allocation2 + $0x40] sm:$0xff]
    %v911 = vld [vmem:[#allocation2 + $0x48] sm:$0xff]
    %v912 = vadd.f32 %v910, %v904
    %v913 = vadd.f32 %v911, %v906
    %v914 = vtanh.pop %v912
    %v915 = vtanh.pop %v913
    %v916 = vpack.c.bf16 %v914, %v914
    %v917 = vpack.c.bf16 %v915, %v915
    %918 = vmatprep.subr.bf16.mxu0 %v659
    %919 = vmatpush1.bf16.msra.mxu0 %v658
    %920 = vmatprep.subr.bf16.mxu0 %v661
    %921 = vmatpush1.bf16.msra.mxu0 %v660
    %922 = vmatprep.subr.bf16.mxu0 %v663
    %923 = vmatpush1.bf16.msra.mxu0 %v662
    %924 = vmatprep.subr.bf16.mxu0 %v665
    %925 = vmatpush1.bf16.msra.mxu0 %v664
    %926 = vmatprep.subr.bf16.mxu0 %v667
    %927 = vmatpush1.bf16.msra.mxu0 %v666
    %928 = vmatprep.subr.bf16.mxu0 %v669
    %929 = vmatpush1.bf16.msra.mxu0 %v668
    %930 = vmatprep.subr.bf16.mxu0 %v671
    %931 = vmatpush1.bf16.msra.mxu0 %v670
    %932 = vmatprep.subr.bf16.mxu0 %v673
    %933 = vmatpush1.bf16.msra.mxu0 %v672
    %934 = vmatprep.subr.bf16.mxu0 %v675
    %935 = vmatpush1.bf16.msra.mxu0 %v674
    %936 = vmatprep.subr.bf16.mxu0 %v677
    %937 = vmatpush1.bf16.msra.mxu0 %v676
    %938 = vmatprep.subr.bf16.mxu0 %v679
    %939 = vmatpush1.bf16.msra.mxu0 %v678
    %940 = vmatprep.subr.bf16.mxu0 %v681
    %941 = vmatpush1.bf16.msra.mxu0 %v680
    %942 = vmatprep.subr.bf16.mxu0 %v683
    %943 = vmatpush1.bf16.msra.mxu0 %v682
    %944 = vmatprep.subr.bf16.mxu0 %v685
    %945 = vmatpush1.bf16.msra.mxu0 %v684
    %946 = vmatprep.subr.bf16.mxu0 %v687
    %947 = vmatpush1.bf16.msra.mxu0 %v686
    %948 = vmatprep.subr.bf16.mxu0 %v689
    %949 = vmatpush1.bf16.msra.mxu0 %v688
    %950 = vmatprep.mubr.bf16.mxu0 %v917
    %951 = vmatmul.mubr.bf16.gmra.mrb[0].mxu0 %v916
    %v952 = vpop.f32.mrb[0].mxu0
    %v953 = vadd.f32 0.0, %v952
    %v954 = vpop.f32.mrb[0].mxu0
    %v955 = vadd.f32 0.0, %v954
    %v956 = vpop.f32.mrb[0].mxu0
    %v957 = vpop.f32.mrb[0].mxu0
    %958 = vdwg.mxu0
    %v959 = vld [vmem:[#allocation2 + $0x50] sm:$0xff]
    %v960 = vld [vmem:[#allocation2 + $0x58] sm:$0xff]
    %v961 = vadd.f32 %v959, %v953
    %v962 = vadd.f32 %v960, %v955
    %v963 = vtanh.pop %v961
    %v964 = vtanh.pop %v962
    %v965 = vpack.c.bf16 %v963, %v963
    %v966 = vpack.c.bf16 %v964, %v964
    %967 = vmatprep.subr.bf16.mxu0 %v659
    %968 = vmatpush1.bf16.msra.mxu0 %v658
    %969 = vmatprep.subr.bf16.mxu0 %v661
    %970 = vmatpush1.bf16.msra.mxu0 %v660
    %971 = vmatprep.subr.bf16.mxu0 %v663
    %972 = vmatpush1.bf16.msra.mxu0 %v662
    %973 = vmatprep.subr.bf16.mxu0 %v665
    %974 = vmatpush1.bf16.msra.mxu0 %v664
    %975 = vmatprep.subr.bf16.mxu0 %v667
    %976 = vmatpush1.bf16.msra.mxu0 %v666
    %977 = vmatprep.subr.bf16.mxu0 %v669
    %978 = vmatpush1.bf16.msra.mxu0 %v668
    %979 = vmatprep.subr.bf16.mxu0 %v671
    %980 = vmatpush1.bf16.msra.mxu0 %v670
    %981 = vmatprep.subr.bf16.mxu0 %v673
    %982 = vmatpush1.bf16.msra.mxu0 %v672
    %983 = vmatprep.subr.bf16.mxu0 %v675
    %984 = vmatpush1.bf16.msra.mxu0 %v674
    %985 = vmatprep.subr.bf16.mxu0 %v677
    %986 = vmatpush1.bf16.msra.mxu0 %v676
    %987 = vmatprep.subr.bf16.mxu0 %v679
    %988 = vmatpush1.bf16.msra.mxu0 %v678
    %989 = vmatprep.subr.bf16.mxu0 %v681
    %990 = vmatpush1.bf16.msra.mxu0 %v680
    %991 = vmatprep.subr.bf16.mxu0 %v683
    %992 = vmatpush1.bf16.msra.mxu0 %v682
    %993 = vmatprep.subr.bf16.mxu0 %v685
    %994 = vmatpush1.bf16.msra.mxu0 %v684
    %995 = vmatprep.subr.bf16.mxu0 %v687
    %996 = vmatpush1.bf16.msra.mxu0 %v686
    %997 = vmatprep.subr.bf16.mxu0 %v689
    %998 = vmatpush1.bf16.msra.mxu0 %v688
    %999 = vmatprep.mubr.bf16.mxu0 %v966
    %1000 = vmatmul.mubr.bf16.gmra.mrb[0].mxu0 %v965
    %v1001 = vpop.f32.mrb[0].mxu0
    %v1002 = vadd.f32 0.0, %v1001
    %v1003 = vpop.f32.mrb[0].mxu0
    %v1004 = vadd.f32 0.0, %v1003
    %v1005 = vpop.f32.mrb[0].mxu0
    %v1006 = vpop.f32.mrb[0].mxu0
    %1007 = vdwg.mxu0
    %v1008 = vld [vmem:[#allocation2 + $0x60] sm:$0xff]
    %v1009 = vld [vmem:[#allocation2 + $0x68] sm:$0xff]
    %v1010 = vadd.f32 %v1008, %v1002
    %v1011 = vadd.f32 %v1009, %v1004
    %v1012 = vtanh.pop %v1010
    %v1013 = vtanh.pop %v1011
    %v1014 = vpack.c.bf16 %v1012, %v1012
    %v1015 = vpack.c.bf16 %v1013, %v1013
    %1016 = vmatprep.subr.bf16.mxu0 %v659
    %1017 = vmatpush1.bf16.msra.mxu0 %v658
    %1018 = vmatprep.subr.bf16.mxu0 %v661
    %1019 = vmatpush1.bf16.msra.mxu0 %v660
    %1020 = vmatprep.subr.bf16.mxu0 %v663
    %1021 = vmatpush1.bf16.msra.mxu0 %v662
    %1022 = vmatprep.subr.bf16.mxu0 %v665
    %1023 = vmatpush1.bf16.msra.mxu0 %v664
    %1024 = vmatprep.subr.bf16.mxu0 %v667
    %1025 = vmatpush1.bf16.msra.mxu0 %v666
    %1026 = vmatprep.subr.bf16.mxu0 %v669
    %1027 = vmatpush1.bf16.msra.mxu0 %v668
    %1028 = vmatprep.subr.bf16.mxu0 %v671
    %1029 = vmatpush1.bf16.msra.mxu0 %v670
    %1030 = vmatprep.subr.bf16.mxu0 %v673
    %1031 = vmatpush1.bf16.msra.mxu0 %v672
    %1032 = vmatprep.subr.bf16.mxu0 %v675
    %1033 = vmatpush1.bf16.msra.mxu0 %v674
    %1034 = vmatprep.subr.bf16.mxu0 %v677
    %1035 = vmatpush1.bf16.msra.mxu0 %v676
    %1036 = vmatprep.subr.bf16.mxu0 %v679
    %1037 = vmatpush1.bf16.msra.mxu0 %v678
    %1038 = vmatprep.subr.bf16.mxu0 %v681
    %1039 = vmatpush1.bf16.msra.mxu0 %v680
    %1040 = vmatprep.subr.bf16.mxu0 %v683
    %1041 = vmatpush1.bf16.msra.mxu0 %v682
    %1042 = vmatprep.subr.bf16.mxu0 %v685
    %1043 = vmatpush1.bf16.msra.mxu0 %v684
    %1044 = vmatprep.subr.bf16.mxu0 %v687
    %1045 = vmatpush1.bf16.msra.mxu0 %v686
    %1046 = vmatprep.subr.bf16.mxu0 %v689
    %1047 = vmatpush1.bf16.msra.mxu0 %v688
    %1048 = vmatprep.mubr.bf16.mxu0 %v1015
    %1049 = vmatmul.mubr.bf16.gmra.mrb[0].mxu0 %v1014
    %v1050 = vpop.f32.mrb[0].mxu0
    %v1051 = vadd.f32 0.0, %v1050
    %v1052 = vpop.f32.mrb[0].mxu0
    %v1053 = vadd.f32 0.0, %v1052
    %v1054 = vpop.f32.mrb[0].mxu0
    %v1055 = vpop.f32.mrb[0].mxu0
    %1056 = vdwg.mxu0
    %v1057 = vld [vmem:[#allocation2 + $0x70] sm:$0xff]
    %v1058 = vld [vmem:[#allocation2 + $0x78] sm:$0xff]
    %v1059 = vadd.f32 %v1057, %v1051
    %v1060 = vadd.f32 %v1058, %v1053
    %v1061 = vtanh.pop %v1059
    %v1062 = vtanh.pop %v1060
    %v1063 = vpack.c.bf16 %v1061, %v1061
    %v1064 = vpack.c.bf16 %v1062, %v1062
    %v1065 = vld [vmem:[#allocation10] sm:$0xff]
    %v1066 = vld [vmem:[#allocation10 + $0x8] sm:$0xff]
    %v1067 = vld [vmem:[#allocation10 + $0x10] sm:$0xff]
    %v1068 = vld [vmem:[#allocation10 + $0x18] sm:$0xff]
    %v1069 = vld [vmem:[#allocation10 + $0x20] sm:$0xff]
    %v1070 = vld [vmem:[#allocation10 + $0x28] sm:$0xff]
    %v1071 = vld [vmem:[#allocation10 + $0x30] sm:$0xff]
    %v1072 = vld [vmem:[#allocation10 + $0x38] sm:$0xff]
    %v1073 = vld [vmem:[#allocation10 + $0x40] sm:$0xff]
    %v1074 = vld [vmem:[#allocation10 + $0x48] sm:$0xff]
    %v1075 = vld [vmem:[#allocation10 + $0x50] sm:$0xff]
    %v1076 = vld [vmem:[#allocation10 + $0x58] sm:$0xff]
    %v1077 = vld [vmem:[#allocation10 + $0x60] sm:$0xff]
    %v1078 = vld [vmem:[#allocation10 + $0x68] sm:$0xff]
    %v1079 = vld [vmem:[#allocation10 + $0x70] sm:$0xff]
    %v1080 = vld [vmem:[#allocation10 + $0x78] sm:$0xff]
    %v1081 = vld [vmem:[#allocation10 + $0x80] sm:$0xff]
    %v1082 = vld [vmem:[#allocation10 + $0x88] sm:$0xff]
    %v1083 = vld [vmem:[#allocation10 + $0x90] sm:$0xff]
    %v1084 = vld [vmem:[#allocation10 + $0x98] sm:$0xff]
    %v1085 = vld [vmem:[#allocation10 + $0xa0] sm:$0xff]
    %v1086 = vld [vmem:[#allocation10 + $0xa8] sm:$0xff]
    %v1087 = vld [vmem:[#allocation10 + $0xb0] sm:$0xff]
    %v1088 = vld [vmem:[#allocation10 + $0xb8] sm:$0xff]
    %v1089 = vld [vmem:[#allocation10 + $0xc0] sm:$0xff]
    %v1090 = vld [vmem:[#allocation10 + $0xc8] sm:$0xff]
    %v1091 = vld [vmem:[#allocation10 + $0xd0] sm:$0xff]
    %v1092 = vld [vmem:[#allocation10 + $0xd8] sm:$0xff]
    %v1093 = vld [vmem:[#allocation10 + $0xe0] sm:$0xff]
    %v1094 = vld [vmem:[#allocation10 + $0xe8] sm:$0xff]
    %v1095 = vld [vmem:[#allocation10 + $0xf0] sm:$0xff]
    %v1096 = vld [vmem:[#allocation10 + $0xf8] sm:$0xff]
    %v1097 = vld [vmem:[%s4] sm:$0x3]
    %v1099 = vlaneseq
    %v1100 = vshrl.u32 %v1099, 7
    %v1101 = vsub.s32 0, %v1100
    %v1102 = vrot.slane %v1097, %v1101
    %v1103 = vlaneseq
    %v1104 = vshrl.u32 %v1103, 7
    %v1105 = vsub.s32 1, %v1104
    %v1106 = vrot.slane %v1097, %v1105
    %v1141 = vunpack.c.l.b16 %v1065
    %v1142 = vunpack.c.h.b16 %v1065
    %v1143 = vunpack.c.l.b16 %v1066
    %v1144 = vunpack.c.h.b16 %v1066
    %v1145 = vunpack.c.l.b16 %v1067
    %v1146 = vunpack.c.h.b16 %v1067
    %v1147 = vunpack.c.l.b16 %v1068
    %v1148 = vunpack.c.h.b16 %v1068
    %v1149 = vunpack.c.l.b16 %v1069
    %v1150 = vunpack.c.h.b16 %v1069
    %v1151 = vunpack.c.l.b16 %v1070
    %v1152 = vunpack.c.h.b16 %v1070
    %v1153 = vunpack.c.l.b16 %v1071
    %v1154 = vunpack.c.h.b16 %v1071
    %v1155 = vunpack.c.l.b16 %v1072
    %v1156 = vunpack.c.h.b16 %v1072
    %v1157 = vunpack.c.l.b16 %v1073
    %v1158 = vunpack.c.h.b16 %v1073
    %v1159 = vunpack.c.l.b16 %v1074
    %v1160 = vunpack.c.h.b16 %v1074
    %v1161 = vunpack.c.l.b16 %v1075
    %v1162 = vunpack.c.h.b16 %v1075
    %v1163 = vunpack.c.l.b16 %v1076
    %v1164 = vunpack.c.h.b16 %v1076
    %v1165 = vunpack.c.l.b16 %v1077
    %v1166 = vunpack.c.h.b16 %v1077
    %v1167 = vunpack.c.l.b16 %v1078
    %v1168 = vunpack.c.h.b16 %v1078
    %v1169 = vunpack.c.l.b16 %v1079
    %v1170 = vunpack.c.h.b16 %v1079
    %v1171 = vunpack.c.l.b16 %v1080
    %v1172 = vunpack.c.h.b16 %v1080
    %v1173 = vunpack.c.l.b16 %v1081
    %v1174 = vunpack.c.h.b16 %v1081
    %v1175 = vunpack.c.l.b16 %v1082
    %v1176 = vunpack.c.h.b16 %v1082
    %v1177 = vunpack.c.l.b16 %v1083
    %v1178 = vunpack.c.h.b16 %v1083
    %v1179 = vunpack.c.l.b16 %v1084
    %v1180 = vunpack.c.h.b16 %v1084
    %v1181 = vunpack.c.l.b16 %v1085
    %v1182 = vunpack.c.h.b16 %v1085
    %v1183 = vunpack.c.l.b16 %v1086
    %v1184 = vunpack.c.h.b16 %v1086
    %v1185 = vunpack.c.l.b16 %v1087
    %v1186 = vunpack.c.h.b16 %v1087
    %v1187 = vunpack.c.l.b16 %v1088
    %v1188 = vunpack.c.h.b16 %v1088
    %v1189 = vunpack.c.l.b16 %v1089
    %v1190 = vunpack.c.h.b16 %v1089
    %v1191 = vunpack.c.l.b16 %v1090
    %v1192 = vunpack.c.h.b16 %v1090
    %v1193 = vunpack.c.l.b16 %v1091
    %v1194 = vunpack.c.h.b16 %v1091
    %v1195 = vunpack.c.l.b16 %v1092
    %v1196 = vunpack.c.h.b16 %v1092
    %v1197 = vunpack.c.l.b16 %v1093
    %v1198 = vunpack.c.h.b16 %v1093
    %v1199 = vunpack.c.l.b16 %v1094
    %v1200 = vunpack.c.h.b16 %v1094
    %v1201 = vunpack.c.l.b16 %v1095
    %v1202 = vunpack.c.h.b16 %v1095
    %v1203 = vunpack.c.l.b16 %v1096
    %v1204 = vunpack.c.h.b16 %v1096
    %v1205 = vpack.c.b16 %v1143, %v1141
    %v1206 = vpack.c.b16 %v1144, %v1142
    %v1207 = vpack.c.b16 %v1147, %v1145
    %v1208 = vpack.c.b16 %v1148, %v1146
    %v1209 = vpack.c.b16 %v1151, %v1149
    %v1210 = vpack.c.b16 %v1152, %v1150
    %v1211 = vpack.c.b16 %v1155, %v1153
    %v1212 = vpack.c.b16 %v1156, %v1154
    %v1213 = vpack.c.b16 %v1159, %v1157
    %v1214 = vpack.c.b16 %v1160, %v1158
    %v1215 = vpack.c.b16 %v1163, %v1161
    %v1216 = vpack.c.b16 %v1164, %v1162
    %v1217 = vpack.c.b16 %v1167, %v1165
    %v1218 = vpack.c.b16 %v1168, %v1166
    %v1219 = vpack.c.b16 %v1171, %v1169
    %v1220 = vpack.c.b16 %v1172, %v1170
    %v1221 = vpack.c.b16 %v1175, %v1173
    %v1222 = vpack.c.b16 %v1176, %v1174
    %v1223 = vpack.c.b16 %v1179, %v1177
    %v1224 = vpack.c.b16 %v1180, %v1178
    %v1225 = vpack.c.b16 %v1183, %v1181
    %v1226 = vpack.c.b16 %v1184, %v1182
    %v1227 = vpack.c.b16 %v1187, %v1185
    %v1228 = vpack.c.b16 %v1188, %v1186
    %v1229 = vpack.c.b16 %v1191, %v1189
    %v1230 = vpack.c.b16 %v1192, %v1190
    %v1231 = vpack.c.b16 %v1195, %v1193
    %v1232 = vpack.c.b16 %v1196, %v1194
    %v1233 = vpack.c.b16 %v1199, %v1197
    %v1234 = vpack.c.b16 %v1200, %v1198
    %v1235 = vpack.c.b16 %v1203, %v1201
    %v1236 = vpack.c.b16 %v1204, %v1202
    %1269 = vmatprep.subr.bf16.mxu0 %v1206
    %1270 = vmatpush1.bf16.msra.mxu0 %v1205
    %1271 = vmatprep.subr.bf16.mxu0 %v1208
    %1272 = vmatpush1.bf16.msra.mxu0 %v1207
    %1273 = vmatprep.subr.bf16.mxu0 %v1210
    %1274 = vmatpush1.bf16.msra.mxu0 %v1209
    %1275 = vmatprep.subr.bf16.mxu0 %v1212
    %1276 = vmatpush1.bf16.msra.mxu0 %v1211
    %1277 = vmatprep.subr.bf16.mxu0 %v1214
    %1278 = vmatpush1.bf16.msra.mxu0 %v1213
    %1279 = vmatprep.subr.bf16.mxu0 %v1216
    %1280 = vmatpush1.bf16.msra.mxu0 %v1215
    %1281 = vmatprep.subr.bf16.mxu0 %v1218
    %1282 = vmatpush1.bf16.msra.mxu0 %v1217
    %1283 = vmatprep.subr.bf16.mxu0 %v1220
    %1284 = vmatpush1.bf16.msra.mxu0 %v1219
    %1285 = vmatprep.subr.bf16.mxu0 %v1222
    %1286 = vmatpush1.bf16.msra.mxu0 %v1221
    %1287 = vmatprep.subr.bf16.mxu0 %v1224
    %1288 = vmatpush1.bf16.msra.mxu0 %v1223
    %1289 = vmatprep.subr.bf16.mxu0 %v1226
    %1290 = vmatpush1.bf16.msra.mxu0 %v1225
    %1291 = vmatprep.subr.bf16.mxu0 %v1228
    %1292 = vmatpush1.bf16.msra.mxu0 %v1227
    %1293 = vmatprep.subr.bf16.mxu0 %v1230
    %1294 = vmatpush1.bf16.msra.mxu0 %v1229
    %1295 = vmatprep.subr.bf16.mxu0 %v1232
    %1296 = vmatpush1.bf16.msra.mxu0 %v1231
    %1297 = vmatprep.subr.bf16.mxu0 %v1234
    %1298 = vmatpush1.bf16.msra.mxu0 %v1233
    %1299 = vmatprep.subr.bf16.mxu0 %v1236
    %1300 = vmatpush1.bf16.msra.mxu0 %v1235
    %1301 = vmatprep.mubr.bf16.mxu0 %v1064
    %1302 = vmatmul.mubr.bf16.gmra.mrb[0].mxu0 %v1063
    %v1303 = vpop.f32.mrb[0].mxu0
    %v1304 = vadd.f32 %v1102, %v1303
    %v1305 = vpop.f32.mrb[0].mxu0
    %v1306 = vadd.f32 %v1106, %v1305
    %v1307 = vpop.f32.mrb[0].mxu0
    %v1308 = vpop.f32.mrb[0].mxu0
    %1309 = vdwg.mxu0
    %1310 = vst [vmem:[#allocation11] sm:$0xff] %v1304
    %1311 = vst [vmem:[#allocation11 + $0x8] sm:$0xff] %v1306
    // Predicated region
    $region38: #{tpu_custom_call.1} parent=1 // pred_check
      _
    $region39: #{tpu_custom_call.1} parent=1 // pred_check_branch
      %1313 = sbr.rel (0) target = $region41
    $region40: #{tpu_custom_call.1} parent=1 // pred_region
      %s1315 = ssub.s32 256, 256
      %1316 = vsyncadd [#allocation5], %s1315
      %s1318 = sshll.u32 [#allocation11], 4
      %s1319 = int_to_ptr.vmem [resolvable:$true] %s1318
      %1321 = dma.vmem_to_hbm [thread:$0]  %s1319, 256, %s5, [#allocation5]
    $region41: #{tpu_custom_call.1} parent=1 // pred_fallthru
      _
    // Predicated region
    $region42: #{tpu_custom_call.1} parent=1 // pred_check
      _
    $region43: #{tpu_custom_call.1} parent=1 // pred_check_branch
      %1323 = sbr.rel (0) target = $region45
    $region44: #{tpu_custom_call.1} parent=1 // pred_region
      %1324 = dma.done [#allocation5], 256
    $region45: #{tpu_custom_call.1} parent=1 // pred_fallthru
      _
    %1325 = vsyncpa [#allocation4], 1
    %1326 = vsyncpa [#allocation9], 1
    %1327 = vsyncpa [#allocation5], 1
    %1328 = vsyncpa [#allocation6], 1

</llo_original>
